<compile_context>
chip_gen: v7x
topology: tpu7x:2x2x1
jax: 0.10.0
libtpu: 0.0.40
codegen_flags: <defaults>
</compile_context>

<pallas_src>
import functools

import jax
import jax.numpy as jnp
import numpy as np
from jax.experimental import pallas as pl
from jax.experimental.pallas import tpu as pltpu


def _round_up(x, m):
    return ((x + m - 1) // m) * m


_MiB = 1024 * 1024


def _vmem_cap_bytes():
    try:
        return int(pltpu.get_tpu_info().vmem_capacity_bytes)
    except Exception:
        return 64 * _MiB  # conservative (v7x physical)


# --------------------------------------------------------------------------
# Phase 1: input projection  proj[b, t, :] = x[b, t, :] @ W_ih^T + (b_ih+b_hh)
# --------------------------------------------------------------------------
def proj_kernel(x_ref, wih_ref, b_ref, out_ref):
    Bp, TT, Ip = x_ref.shape
    Hp = out_ref.shape[-1]
    # TT % 8 == 0 -> this reshape is a free retiling (no relayout copy).
    xb = x_ref[...].reshape(Bp * TT, Ip)
    acc = jnp.dot(xb, wih_ref[...], preferred_element_type=jnp.float32) + b_ref[...]
    out_ref[...] = acc.reshape(Bp, TT, Hp)


# --------------------------------------------------------------------------
# Phase 2: recurrence  h_t = tanh(proj_t + h_{t-1} @ W_hh^T), fused head:
#          out = sigmoid(h_T @ W_fc^T + b_fc) written on the last grid step.
# --------------------------------------------------------------------------
def recur_kernel(proj_ref, whh_hbm, wfc_ref, bfc_ref, out_ref,
                 whh_vmem, h_scratch, copy_sem, *, tt_block, tail_steps):
    tb = pl.program_id(0)
    nt = pl.num_programs(0)

    @pl.when(tb == 0)
    def _():
        # One-time copy of the constant recurrent weight into a SINGLE VMEM
        # buffer: no double-buffering of W_hh (safe here because this grid
        # axis is "arbitrary" => sequential on one core, so tb==0 runs first).
        cp = pltpu.make_async_copy(whh_hbm, whh_vmem, copy_sem)
        cp.start()
        cp.wait()
        h_scratch[...] = jnp.zeros_like(h_scratch)  # h0 = zeros

    whh = whh_vmem[...]

    def run_steps(n_steps):
        # Static unroll: only the (Bp,Hp)x(Hp,Hp) matmul + tanh sit on the
        # sequential critical path; proj_t is just a VMEM read.
        # TODO(synk): for very large TT, switch to lax.fori_loop with partial
        # unroll (e.g. 8) to cap code size / vreg live ranges.
        h = h_scratch[...]
        for tt in range(n_steps):
            pre = proj_ref[:, tt, :] + jnp.dot(h, whh,
                                               preferred_element_type=jnp.float32)
            h = jnp.tanh(pre)
        h_scratch[...] = h

    if tail_steps == tt_block:
        # No padded timesteps anywhere: one uniform path, no masking at all.
        run_steps(tt_block)
    else:
        # Padded tail exists only in the LAST block (Tp = NT*TT, Tp-TT < T),
        # so non-last blocks run the full unroll and the last block runs a
        # statically shorter unroll — padded steps are skipped entirely.
        @pl.when(tb < nt - 1)
        def _():
            run_steps(tt_block)

        @pl.when(tb == nt - 1)
        def _():
            run_steps(tail_steps)

    @pl.when(tb == nt - 1)
    def _():
        # Fused head: sigmoid(h_T @ W_fc^T + b_fc).  Output block index is
        # constant -> single HBM writeback at grid end.
        h = h_scratch[...]
        logits = (jnp.dot(h, wfc_ref[...], preferred_element_type=jnp.float32)
                  + bfc_ref[...])
        out_ref[...] = jax.nn.sigmoid(logits)


def rnn_forward(x, params, *, tt_max=128):
    """x: (B, T, I) float32, batch_first. Returns (B, O) float32."""
    w_ih, w_hh, b_ih, b_hh, w_fc, b_fc = params
    B, T, I = x.shape
    H = w_hh.shape[0]
    O = w_fc.shape[0]

    # Hardware-friendly padded sizes: 8-sublane batch, 128-lane feature dims.
    Bp = _round_up(B, 8)
    Ip = _round_up(I, 128)
    Hp = _round_up(H, 128)
    Op = _round_up(O, 128)

    # Time blocking: TT is always a multiple of 8 so BlockSpec sublane rules
    # hold by divisibility and proj_kernel's reshape is a free retiling.
    assert tt_max % 8 == 0
    TT = min(_round_up(T, 8), tt_max)
    Tp = _round_up(T, TT)
    NT = Tp // TT
    tail_steps = T - (NT - 1) * TT  # real timesteps in the last block (1..TT)

    f32 = jnp.float32
    # TODO(synk): for H >= ~2048 on v7x, cast W_ih/W_hh (and h for the matmul)
    # to bf16 with f32 accumulation to halve VMEM residency / hit MXU bf16 rate.
    xp    = jnp.zeros((Bp, Tp, Ip), f32).at[:B, :T, :I].set(x.astype(f32))
    wih_t = jnp.zeros((Ip, Hp), f32).at[:I, :H].set(w_ih.T.astype(f32))
    whh_t = jnp.zeros((Hp, Hp), f32).at[:H, :H].set(w_hh.T.astype(f32))
    bias  = jnp.zeros((1, Hp), f32).at[0, :H].set((b_ih + b_hh).astype(f32))
    wfc_t = jnp.zeros((Hp, Op), f32).at[:H, :O].set(w_fc.T.astype(f32))
    bfc   = jnp.zeros((1, Op), f32).at[0, :O].set(b_fc.astype(f32))

    vmem_cap = _vmem_cap_bytes()

    def _vmem_limit(footprint_bytes):
        # Raise the scoped-VMEM limit when the block footprint needs it
        # (default scope is only 16/32 MiB), but never below the default-ish
        # 32 MiB and never above (most of) physical VMEM.
        return int(min(max(footprint_bytes + 4 * _MiB, 32 * _MiB),
                       vmem_cap - 4 * _MiB))

    # --- phase 1: hoisted input projection, parallel over time blocks --------
    # Footprint: x block x2 + proj block x2 (double-buffered) + W_ih/bias x2.
    # TODO(synk): single-buffer W_ih (pl.Buffered(1)) for very large Ip*Hp on
    # v7x; the tb==0 manual-copy trick is NOT safe here because this grid axis
    # is "parallel" (megacore-sharded).
    p1_bytes = 4 * (2 * Bp * TT * Ip + 2 * Bp * TT * Hp + 2 * Ip * Hp + 2 * Hp)
    proj = pl.pallas_call(
        proj_kernel,
        out_shape=jax.ShapeDtypeStruct((Bp, Tp, Hp), f32),
        grid=(NT,),
        in_specs=[
            pl.BlockSpec((Bp, TT, Ip), lambda tb: (0, tb, 0)),
            pl.BlockSpec((Ip, Hp), lambda tb: (0, 0)),
            pl.BlockSpec((1, Hp), lambda tb: (0, 0)),
        ],
        out_specs=pl.BlockSpec((Bp, TT, Hp), lambda tb: (0, tb, 0)),
        compiler_params=pltpu.CompilerParams(
            dimension_semantics=("parallel",),
            vmem_limit_bytes=_vmem_limit(p1_bytes)),
    )(xp, wih_t, bias)

    # --- phase 2: sequential recurrence over time blocks + fused head --------
    # TODO(synk): on v7x with Bp >= 16, add a leading "parallel" batch grid
    # axis to split the (batch-independent) recurrence across the 2 TensorCores.
    # TODO(synk): on v5e (slow HBM) optionally fuse phase 1 into this kernel's
    # prologue to avoid the HBM round trip of `proj`.
    p2_bytes = 4 * (2 * Bp * TT * Hp        # proj block, double-buffered
                    + Hp * Hp               # W_hh, single VMEM copy
                    + 2 * Hp * Op + 2 * Op  # W_fc / b_fc constant blocks
                    + Bp * Hp               # h carry scratch
                    + 2 * Bp * Op)          # output block
    out_p = pl.pallas_call(
        functools.partial(recur_kernel, tt_block=TT, tail_steps=tail_steps),
        out_shape=jax.ShapeDtypeStruct((Bp, Op), f32),
        grid=(NT,),
        in_specs=[
            pl.BlockSpec((Bp, TT, Hp), lambda tb: (0, tb, 0)),
            pl.BlockSpec(memory_space=pl.ANY),        # W_hh: raw HBM, copied once
            pl.BlockSpec((Hp, Op), lambda tb: (0, 0)),
            pl.BlockSpec((1, Op), lambda tb: (0, 0)),
        ],
        out_specs=pl.BlockSpec((Bp, Op), lambda tb: (0, 0)),
        scratch_shapes=[
            pltpu.VMEM((Hp, Hp), f32),        # single-buffered W_hh
            pltpu.VMEM((Bp, Hp), f32),        # h carry
            pltpu.SemaphoreType.DMA(()),      # one-time W_hh copy
        ],
        compiler_params=pltpu.CompilerParams(
            dimension_semantics=("arbitrary",),
            vmem_limit_bytes=_vmem_limit(p2_bytes)),
    )(proj, whh_t, wfc_t, bfc)

    return out_p[:B, :O]


# --------------------------------------------------------------------------
# Pure-JAX reference matching nn.RNN(tanh, batch_first) + Linear + Sigmoid
# --------------------------------------------------------------------------
def rnn_reference(x, params):
    w_ih, w_hh, b_ih, b_hh, w_fc, b_fc = params
    B = x.shape[0]
    H = w_hh.shape[0]
    h0 = jnp.zeros((B, H), jnp.float32)

    def step(h, x_t):
        h = jnp.tanh(x_t @ w_ih.T + b_ih + h @ w_hh.T + b_hh)
        return h, None

    h_last, _ = jax.lax.scan(step, h0, jnp.transpose(x, (1, 0, 2)))
    return jax.nn.sigmoid(h_last @ w_fc.T + b_fc)


def init_params(key, input_size, hidden_size, output_size):
    # Deterministic init mimicking PyTorch's uniform(-1/sqrt(H), 1/sqrt(H)).
    ks = jax.random.split(key, 6)
    s = 1.0 / np.sqrt(hidden_size)
    w_ih = jax.random.uniform(ks[0], (hidden_size, input_size), jnp.float32, -s, s)
    w_hh = jax.random.uniform(ks[1], (hidden_size, hidden_size), jnp.float32, -s, s)
    b_ih = jax.random.uniform(ks[2], (hidden_size,), jnp.float32, -s, s)
    b_hh = jax.random.uniform(ks[3], (hidden_size,), jnp.float32, -s, s)
    w_fc = jax.random.uniform(ks[4], (output_size, hidden_size), jnp.float32, -s, s)
    b_fc = jax.random.uniform(ks[5], (output_size,), jnp.float32, -s, s)
    return (w_ih, w_hh, b_ih, b_hh, w_fc, b_fc)


if __name__ == "__main__":
    key = jax.random.PRNGKey(0)

    # Case 1: small shapes consistent with the module (T multiple of 8).
    B, T, I, H, O = 2, 8, 16, 32, 8
    k_x, k_p = jax.random.split(key)
    x = jax.random.normal(k_x, (B, T, I), jnp.float32)
    params = init_params(k_p, I, H, O)

    out = jax.block_until_ready(jax.jit(rnn_forward)(x, params))
    ref = jax.block_until_ready(rnn_reference(x, params))
    assert out.shape == (B, O), out.shape
    np.testing.assert_allclose(np.asarray(out), np.asarray(ref), rtol=1e-5, atol=1e-5)

    # Case 2: ragged T (exercises the multi-block + padded-tail path).
    B2, T2 = 3, 13
    k_x2, _ = jax.random.split(k_x)
    x2 = jax.random.normal(k_x2, (B2, T2, I), jnp.float32)
    fwd2 = jax.jit(functools.partial(rnn_forward, tt_max=8))
    out2 = jax.block_until_ready(fwd2(x2, params))
    ref2 = jax.block_until_ready(rnn_reference(x2, params))
    np.testing.assert_allclose(np.asarray(out2), np.asarray(ref2), rtol=1e-5, atol=1e-5)

    print("KERNEL_OK")
</pallas_src>

<mosaic_0001>
module attributes {stable_mosaic.version = 11 : i64} {
  func.func @proj_kernel(%arg0: i32, %arg1: memref<8x8x128xf32, #tpu.memory_space<vmem>>, %arg2: memref<128x128xf32, #tpu.memory_space<vmem>>, %arg3: memref<1x128xf32, #tpu.memory_space<vmem>>, %arg4: memref<8x8x128xf32, #tpu.memory_space<vmem>>) attributes {dimension_semantics = [#tpu.dimension_semantics<parallel>], iteration_bounds = array<i64: 1>, scalar_prefetch = 0 : i64, scratch_operands = 0 : i64, tpu.core_type = #tpu.core_type<tc>, window_params = [{transform_indices = @transform_0, window_bounds = array<i64: 8, 8, 128>}, {pipeline_mode = #tpu.pipeline_mode<synchronous>, transform_indices = @transform_1, window_bounds = array<i64: 128, 128>}, {pipeline_mode = #tpu.pipeline_mode<synchronous>, transform_indices = @transform_2, window_bounds = array<i64: 1, 128>}, {transform_indices = @transform_3, window_bounds = array<i64: 8, 8, 128>}]} {
    %c0 = arith.constant 0 : index
    %c0_0 = arith.constant 0 : index
    %c0_1 = arith.constant 0 : index
    %0 = vector.load %arg1[%c0, %c0_0, %c0_1] : memref<8x8x128xf32, #tpu.memory_space<vmem>>, vector<8x8x128xf32>
    %1 = vector.shape_cast %0 : vector<8x8x128xf32> to vector<64x128xf32>
    %c0_2 = arith.constant 0 : index
    %c0_3 = arith.constant 0 : index
    %2 = vector.load %arg2[%c0_2, %c0_3] : memref<128x128xf32, #tpu.memory_space<vmem>>, vector<128x128xf32>
    %cst = arith.constant dense<0.000000e+00> : vector<64x128xf32>
    %3 = tpu.matmul %1, %2, %cst {dimension_numbers = #tpu.dot_dimension_numbers<[1], [0], [0], [1], [0, 0, 1, 1], [], []>} : vector<64x128xf32>, vector<128x128xf32>, vector<64x128xf32> -> vector<64x128xf32>
    %c0_4 = arith.constant 0 : index
    %c0_5 = arith.constant 0 : index
    %4 = vector.load %arg3[%c0_4, %c0_5] : memref<1x128xf32, #tpu.memory_space<vmem>>, vector<1x128xf32>
    %5 = vector.broadcast %4 : vector<1x128xf32> to vector<64x128xf32>
    %6 = arith.addf %3, %5 : vector<64x128xf32>
    %7 = vector.shape_cast %6 : vector<64x128xf32> to vector<8x8x128xf32>
    %c0_6 = arith.constant 0 : index
    %c0_7 = arith.constant 0 : index
    %c0_8 = arith.constant 0 : index
    %8 = vector.load %arg4[%c0_6, %c0_7, %c0_8] : memref<8x8x128xf32, #tpu.memory_space<vmem>>, vector<8x8x128xf32>
    tpu.vector_store %arg4[%c0_6, %c0_7, %c0_8], %7 {strides = array<i32>} : memref<8x8x128xf32, #tpu.memory_space<vmem>>, vector<8x8x128xf32>,
    return
  }
  func.func @transform_0(%arg0: i32) -> (i32, i32, i32) {
    %c0_i32 = arith.constant 0 : i32
    %c0_i32_0 = arith.constant 0 : i32
    %c0_i32_1 = arith.constant 0 : i32
    return %c0_i32, %arg0, %c0_i32_0 : i32, i32, i32
  }
  func.func @transform_1(%arg0: i32) -> (i32, i32) {
    %c0_i32 = arith.constant 0 : i32
    %c0_i32_0 = arith.constant 0 : i32
    %c0_i32_1 = arith.constant 0 : i32
    return %c0_i32, %c0_i32_0 : i32, i32
  }
  func.func @transform_2(%arg0: i32) -> (i32, i32) {
    %c0_i32 = arith.constant 0 : i32
    %c0_i32_0 = arith.constant 0 : i32
    %c0_i32_1 = arith.constant 0 : i32
    return %c0_i32, %c0_i32_0 : i32, i32
  }
  func.func @transform_3(%arg0: i32) -> (i32, i32, i32) {
    %c0_i32 = arith.constant 0 : i32
    %c0_i32_0 = arith.constant 0 : i32
    %c0_i32_1 = arith.constant 0 : i32
    return %c0_i32, %arg0, %c0_i32_0 : i32, i32, i32
  }
}

module attributes {stable_mosaic.version = 11 : i64} {
  func.func @recur_kernel(%arg0: i32, %arg1: memref<8x8x128xf32, #tpu.memory_space<vmem>>, %arg2: memref<128x128xf32, #tpu.memory_space<any>>, %arg3: memref<128x128xf32, #tpu.memory_space<vmem>>, %arg4: memref<1x128xf32, #tpu.memory_space<vmem>>, %arg5: memref<8x128xf32, #tpu.memory_space<vmem>>, %arg6: memref<128x128xf32, #tpu.memory_space<vmem>>, %arg7: memref<8x128xf32, #tpu.memory_space<vmem>>, %arg8: memref<!tpu.dma_semaphore, #tpu.memory_space<semaphore_mem>>) attributes {dimension_semantics = [#tpu.dimension_semantics<arbitrary>], iteration_bounds = array<i64: 1>, scalar_prefetch = 0 : i64, scratch_operands = 3 : i64, tpu.core_type = #tpu.core_type<tc>, window_params = [{transform_indices = @transform_0, window_bounds = array<i64: 8, 8, 128>}, {}, {pipeline_mode = #tpu.pipeline_mode<synchronous>, transform_indices = @transform_2, window_bounds = array<i64: 128, 128>}, {pipeline_mode = #tpu.pipeline_mode<synchronous>, transform_indices = @transform_3, window_bounds = array<i64: 1, 128>}, {pipeline_mode = #tpu.pipeline_mode<synchronous>, transform_indices = @transform_4, window_bounds = array<i64: 8, 128>}]} {
    %c0_i32 = arith.constant 0 : i32
    %0 = arith.cmpi eq, %arg0, %c0_i32 : i32
    %1 = arith.extui %0 : i1 to i32
    %c0_i32_0 = arith.constant 0 : i32
    %2 = arith.cmpi ne, %1, %c0_i32_0 : i32
    scf.if %2 {
      tpu.enqueue_dma source(%arg2 : memref<128x128xf32, #tpu.memory_space<any>>) target(%arg6 : memref<128x128xf32, #tpu.memory_space<vmem>>) target_semaphore(%arg8 : memref<!tpu.dma_semaphore, #tpu.memory_space<semaphore_mem>>)
      tpu.wait_dma2 semaphore(%arg8 : memref<!tpu.dma_semaphore, #tpu.memory_space<semaphore_mem>>) src(%arg2 : memref<128x128xf32, #tpu.memory_space<any>>) dst(%arg6 : memref<128x128xf32, #tpu.memory_space<vmem>>)
      %cst_32 = arith.constant 0.000000e+00 : f32
      %49 = vector.broadcast %cst_32 : f32 to vector<8x128xf32>
      %c0_33 = arith.constant 0 : index
      %c0_34 = arith.constant 0 : index
      %50 = vector.load %arg7[%c0_33, %c0_34] : memref<8x128xf32, #tpu.memory_space<vmem>>, vector<8x128xf32>
      tpu.vector_store %arg7[%c0_33, %c0_34], %49 {strides = array<i32>} : memref<8x128xf32, #tpu.memory_space<vmem>>, vector<8x128xf32>,
    } else {
    }
    %c0 = arith.constant 0 : index
    %c0_1 = arith.constant 0 : index
    %3 = vector.load %arg6[%c0, %c0_1] : memref<128x128xf32, #tpu.memory_space<vmem>>, vector<128x128xf32>
    %c0_2 = arith.constant 0 : index
    %c0_3 = arith.constant 0 : index
    %4 = vector.load %arg7[%c0_2, %c0_3] : memref<8x128xf32, #tpu.memory_space<vmem>>, vector<8x128xf32>
    %c0_4 = arith.constant 0 : index
    %c0_5 = arith.constant 0 : index
    %c0_6 = arith.constant 0 : index
    %5 = vector.load %arg1[%c0_4, %c0_5, %c0_6] : memref<8x8x128xf32, #tpu.memory_space<vmem>>, vector<8x1x128xf32>
    %6 = vector.shape_cast %5 : vector<8x1x128xf32> to vector<8x128xf32>
    %cst = arith.constant dense<0.000000e+00> : vector<8x128xf32>
    %7 = tpu.matmul %4, %3, %cst {dimension_numbers = #tpu.dot_dimension_numbers<[1], [0], [0], [1], [0, 0, 1, 1], [], []>} : vector<8x128xf32>, vector<128x128xf32>, vector<8x128xf32> -> vector<8x128xf32>
    %8 = arith.addf %6, %7 : vector<8x128xf32>
    %9 = math.tanh %8 : vector<8x128xf32>
    %c0_7 = arith.constant 0 : index
    %c1 = arith.constant 1 : index
    %c0_8 = arith.constant 0 : index
    %10 = vector.load %arg1[%c0_7, %c1, %c0_8] : memref<8x8x128xf32, #tpu.memory_space<vmem>>, vector<8x1x128xf32>
    %11 = vector.shape_cast %10 : vector<8x1x128xf32> to vector<8x128xf32>
    %cst_9 = arith.constant dense<0.000000e+00> : vector<8x128xf32>
    %12 = tpu.matmul %9, %3, %cst_9 {dimension_numbers = #tpu.dot_dimension_numbers<[1], [0], [0], [1], [0, 0, 1, 1], [], []>} : vector<8x128xf32>, vector<128x128xf32>, vector<8x128xf32> -> vector<8x128xf32>
    %13 = arith.addf %11, %12 : vector<8x128xf32>
    %14 = math.tanh %13 : vector<8x128xf32>
    %c0_10 = arith.constant 0 : index
    %c2 = arith.constant 2 : index
    %c0_11 = arith.constant 0 : index
    %15 = vector.load %arg1[%c0_10, %c2, %c0_11] : memref<8x8x128xf32, #tpu.memory_space<vmem>>, vector<8x1x128xf32>
    %16 = vector.shape_cast %15 : vector<8x1x128xf32> to vector<8x128xf32>
    %cst_12 = arith.constant dense<0.000000e+00> : vector<8x128xf32>
    %17 = tpu.matmul %14, %3, %cst_12 {dimension_numbers = #tpu.dot_dimension_numbers<[1], [0], [0], [1], [0, 0, 1, 1], [], []>} : vector<8x128xf32>, vector<128x128xf32>, vector<8x128xf32> -> vector<8x128xf32>
    %18 = arith.addf %16, %17 : vector<8x128xf32>
    %19 = math.tanh %18 : vector<8x128xf32>
    %c0_13 = arith.constant 0 : index
    %c3 = arith.constant 3 : index
    %c0_14 = arith.constant 0 : index
    %20 = vector.load %arg1[%c0_13, %c3, %c0_14] : memref<8x8x128xf32, #tpu.memory_space<vmem>>, vector<8x1x128xf32>
    %21 = vector.shape_cast %20 : vector<8x1x128xf32> to vector<8x128xf32>
    %cst_15 = arith.constant dense<0.000000e+00> : vector<8x128xf32>
    %22 = tpu.matmul %19, %3, %cst_15 {dimension_numbers = #tpu.dot_dimension_numbers<[1], [0], [0], [1], [0, 0, 1, 1], [], []>} : vector<8x128xf32>, vector<128x128xf32>, vector<8x128xf32> -> vector<8x128xf32>
    %23 = arith.addf %21, %22 : vector<8x128xf32>
    %24 = math.tanh %23 : vector<8x128xf32>
    %c0_16 = arith.constant 0 : index
    %c4 = arith.constant 4 : index
    %c0_17 = arith.constant 0 : index
    %25 = vector.load %arg1[%c0_16, %c4, %c0_17] : memref<8x8x128xf32, #tpu.memory_space<vmem>>, vector<8x1x128xf32>
    %26 = vector.shape_cast %25 : vector<8x1x128xf32> to vector<8x128xf32>
    %cst_18 = arith.constant dense<0.000000e+00> : vector<8x128xf32>
    %27 = tpu.matmul %24, %3, %cst_18 {dimension_numbers = #tpu.dot_dimension_numbers<[1], [0], [0], [1], [0, 0, 1, 1], [], []>} : vector<8x128xf32>, vector<128x128xf32>, vector<8x128xf32> -> vector<8x128xf32>
    %28 = arith.addf %26, %27 : vector<8x128xf32>
    %29 = math.tanh %28 : vector<8x128xf32>
    %c0_19 = arith.constant 0 : index
    %c5 = arith.constant 5 : index
    %c0_20 = arith.constant 0 : index
    %30 = vector.load %arg1[%c0_19, %c5, %c0_20] : memref<8x8x128xf32, #tpu.memory_space<vmem>>, vector<8x1x128xf32>
    %31 = vector.shape_cast %30 : vector<8x1x128xf32> to vector<8x128xf32>
    %cst_21 = arith.constant dense<0.000000e+00> : vector<8x128xf32>
    %32 = tpu.matmul %29, %3, %cst_21 {dimension_numbers = #tpu.dot_dimension_numbers<[1], [0], [0], [1], [0, 0, 1, 1], [], []>} : vector<8x128xf32>, vector<128x128xf32>, vector<8x128xf32> -> vector<8x128xf32>
    %33 = arith.addf %31, %32 : vector<8x128xf32>
    %34 = math.tanh %33 : vector<8x128xf32>
    %c0_22 = arith.constant 0 : index
    %c6 = arith.constant 6 : index
    %c0_23 = arith.constant 0 : index
    %35 = vector.load %arg1[%c0_22, %c6, %c0_23] : memref<8x8x128xf32, #tpu.memory_space<vmem>>, vector<8x1x128xf32>
    %36 = vector.shape_cast %35 : vector<8x1x128xf32> to vector<8x128xf32>
    %cst_24 = arith.constant dense<0.000000e+00> : vector<8x128xf32>
    %37 = tpu.matmul %34, %3, %cst_24 {dimension_numbers = #tpu.dot_dimension_numbers<[1], [0], [0], [1], [0, 0, 1, 1], [], []>} : vector<8x128xf32>, vector<128x128xf32>, vector<8x128xf32> -> vector<8x128xf32>
    %38 = arith.addf %36, %37 : vector<8x128xf32>
    %39 = math.tanh %38 : vector<8x128xf32>
    %c0_25 = arith.constant 0 : index
    %c7 = arith.constant 7 : index
    %c0_26 = arith.constant 0 : index
    %40 = vector.load %arg1[%c0_25, %c7, %c0_26] : memref<8x8x128xf32, #tpu.memory_space<vmem>>, vector<8x1x128xf32>
    %41 = vector.shape_cast %40 : vector<8x1x128xf32> to vector<8x128xf32>
    %cst_27 = arith.constant dense<0.000000e+00> : vector<8x128xf32>
    %42 = tpu.matmul %39, %3, %cst_27 {dimension_numbers = #tpu.dot_dimension_numbers<[1], [0], [0], [1], [0, 0, 1, 1], [], []>} : vector<8x128xf32>, vector<128x128xf32>, vector<8x128xf32> -> vector<8x128xf32>
    %43 = arith.addf %41, %42 : vector<8x128xf32>
    %44 = math.tanh %43 : vector<8x128xf32>
    %c0_28 = arith.constant 0 : index
    %c0_29 = arith.constant 0 : index
    %45 = vector.load %arg7[%c0_28, %c0_29] : memref<8x128xf32, #tpu.memory_space<vmem>>, vector<8x128xf32>
    tpu.vector_store %arg7[%c0_28, %c0_29], %44 {strides = array<i32>} : memref<8x128xf32, #tpu.memory_space<vmem>>, vector<8x128xf32>,
    %c0_i32_30 = arith.constant 0 : i32
    %46 = arith.cmpi eq, %arg0, %c0_i32_30 : i32
    %47 = arith.extui %46 : i1 to i32
    %c0_i32_31 = arith.constant 0 : i32
    %48 = arith.cmpi ne, %47, %c0_i32_31 : i32
    scf.if %48 {
      %c0_32 = arith.constant 0 : index
      %c0_33 = arith.constant 0 : index
      %49 = vector.load %arg7[%c0_32, %c0_33] : memref<8x128xf32, #tpu.memory_space<vmem>>, vector<8x128xf32>
      %c0_34 = arith.constant 0 : index
      %c0_35 = arith.constant 0 : index
      %50 = vector.load %arg3[%c0_34, %c0_35] : memref<128x128xf32, #tpu.memory_space<vmem>>, vector<128x128xf32>
      %cst_36 = arith.constant dense<0.000000e+00> : vector<8x128xf32>
      %51 = tpu.matmul %49, %50, %cst_36 {dimension_numbers = #tpu.dot_dimension_numbers<[1], [0], [0], [1], [0, 0, 1, 1], [], []>} : vector<8x128xf32>, vector<128x128xf32>, vector<8x128xf32> -> vector<8x128xf32>
      %c0_37 = arith.constant 0 : index
      %c0_38 = arith.constant 0 : index
      %52 = vector.load %arg4[%c0_37, %c0_38] : memref<1x128xf32, #tpu.memory_space<vmem>>, vector<1x128xf32>
      %53 = vector.broadcast %52 : vector<1x128xf32> to vector<8x128xf32>
      %54 = arith.addf %51, %53 : vector<8x128xf32>
      %55 = arith.negf %54 : vector<8x128xf32>
      %56 = math.exp %55 : vector<8x128xf32>
      %cst_39 = arith.constant 1.000000e+00 : f32
      %57 = vector.broadcast %cst_39 : f32 to vector<8x128xf32>
      %58 = arith.addf %57, %56 : vector<8x128xf32>
      %59 = arith.divf %57, %58 : vector<8x128xf32>
      %c0_40 = arith.constant 0 : index
      %c0_41 = arith.constant 0 : index
      %60 = vector.load %arg5[%c0_40, %c0_41] : memref<8x128xf32, #tpu.memory_space<vmem>>, vector<8x128xf32>
      tpu.vector_store %arg5[%c0_40, %c0_41], %59 {strides = array<i32>} : memref<8x128xf32, #tpu.memory_space<vmem>>, vector<8x128xf32>,
    } else {
    }
    return
  }
  func.func @transform_0(%arg0: i32) -> (i32, i32, i32) {
    %c0_i32 = arith.constant 0 : i32
    %c0_i32_0 = arith.constant 0 : i32
    %c0_i32_1 = arith.constant 0 : i32
    return %c0_i32, %arg0, %c0_i32_0 : i32, i32, i32
  }
  func.func @transform_2(%arg0: i32) -> (i32, i32) {
    %c0_i32 = arith.constant 0 : i32
    %c0_i32_0 = arith.constant 0 : i32
    %c0_i32_1 = arith.constant 0 : i32
    return %c0_i32, %c0_i32_0 : i32, i32
  }
  func.func @transform_3(%arg0: i32) -> (i32, i32) {
    %c0_i32 = arith.constant 0 : i32
    %c0_i32_0 = arith.constant 0 : i32
    %c0_i32_1 = arith.constant 0 : i32
    return %c0_i32, %c0_i32_0 : i32, i32
  }
  func.func @transform_4(%arg0: i32) -> (i32, i32) {
    %c0_i32 = arith.constant 0 : i32
    %c0_i32_0 = arith.constant 0 : i32
    %c0_i32_1 = arith.constant 0 : i32
    return %c0_i32, %c0_i32_0 : i32, i32
  }
}

</mosaic_0001>

<llo_original>
// kernel: rnn_forward.2
$region0: #{rnn_forward.2}
  #allocation0 [shape = 'u32[]', space=smem, size = 0x4, offset = 0x4, fixed_abs, tag = 'smem constant byte address 0x4 - core index']
  #allocation1 [shape = 'u32[144,128]{1,0:T(1,128)}', space=vmem, size = 0x12000, scoped, tag = 'internal scratch']
  %s0 = inlined_call_operand.vmem [shape: f32[8,8,128], index: 0, kind: input, shape index: {}]
  %s1 = inlined_call_operand.vmem [shape: f32[128,128], index: 1, kind: input, shape index: {}]
  %s2 = inlined_call_operand.vmem [shape: f32[1,128], index: 2, kind: input, shape index: {}]
  %s3 = inlined_call_operand.vmem [shape: f32[8,8,128], index: 3, kind: output, shape index: {}]
  %s4 = sld [smem:[#allocation0]]
  $region22: #{rnn_forward.2} parent=0
    _
  %s6 = ssub.s32 1, %s4
  %s7 = scalar_select 0, %s6, %s4
  // Predicated region
  $region2: #{rnn_forward.2} parent=0 // pred_check
    _
  $region3: #{rnn_forward.2} parent=0 // pred_check_branch
    %9 = sbr.rel (0) target = $region5
  $region4: #{rnn_forward.2} parent=0 // pred_region
    _
  $region5: #{rnn_forward.2} parent=0 // pred_fallthru
    _
  // Predicated region
  $region6: #{rnn_forward.2} parent=0 // pred_check
    _
  $region7: #{rnn_forward.2} parent=0 // pred_check_branch
    %11 = sbr.rel (0) target = $region9
  $region8: #{rnn_forward.2} parent=0 // pred_region
    _
  $region9: #{rnn_forward.2} parent=0 // pred_fallthru
    _
  // Predicated region
  $region10: #{rnn_forward.2} parent=0 // pred_check
    _
  $region11: #{rnn_forward.2} parent=0 // pred_check_branch
    %13 = sbr.rel (0) target = $region13
  $region12: #{rnn_forward.2} parent=0 // pred_region
    _
  $region13: #{rnn_forward.2} parent=0 // pred_fallthru
    _
  %v14 = vld [vmem:[%s0] sm:$0xff]
  %v15 = vld [vmem:[%s0 + $0x8] sm:$0xff]
  %v16 = vld [vmem:[%s0 + $0x10] sm:$0xff]
  %v17 = vld [vmem:[%s0 + $0x18] sm:$0xff]
  %v18 = vld [vmem:[%s0 + $0x20] sm:$0xff]
  %v19 = vld [vmem:[%s0 + $0x28] sm:$0xff]
  %v20 = vld [vmem:[%s0 + $0x30] sm:$0xff]
  %v21 = vld [vmem:[%s0 + $0x38] sm:$0xff]
  %v22 = vld [vmem:[%s1] sm:$0xff]
  %v23 = vld [vmem:[%s1 + $0x8] sm:$0xff]
  %v24 = vld [vmem:[%s1 + $0x10] sm:$0xff]
  %v25 = vld [vmem:[%s1 + $0x18] sm:$0xff]
  %v26 = vld [vmem:[%s1 + $0x20] sm:$0xff]
  %v27 = vld [vmem:[%s1 + $0x28] sm:$0xff]
  %v28 = vld [vmem:[%s1 + $0x30] sm:$0xff]
  %v29 = vld [vmem:[%s1 + $0x38] sm:$0xff]
  %v30 = vld [vmem:[%s1 + $0x40] sm:$0xff]
  %v31 = vld [vmem:[%s1 + $0x48] sm:$0xff]
  %v32 = vld [vmem:[%s1 + $0x50] sm:$0xff]
  %v33 = vld [vmem:[%s1 + $0x58] sm:$0xff]
  %v34 = vld [vmem:[%s1 + $0x60] sm:$0xff]
  %v35 = vld [vmem:[%s1 + $0x68] sm:$0xff]
  %v36 = vld [vmem:[%s1 + $0x70] sm:$0xff]
  %v37 = vld [vmem:[%s1 + $0x78] sm:$0xff]
  %v38 = vld [vmem:[%s2] sm:$0x1]
  %v40 = vlaneseq
  %v41 = vshrl.u32 %v40, 7
  %v42 = vsub.s32 0, %v41
  %v43 = vrot.slane %v38, %v42
  %45 = vmatprep.subr.mxu0 0.0
  %46 = vmatpush1.msra.mxu0 %v22
  %47 = vmatprep.subr.mxu0 0.0
  %48 = vmatpush1.msra.mxu0 %v23
  %49 = vmatprep.subr.mxu0 0.0
  %50 = vmatpush1.msra.mxu0 %v24
  %51 = vmatprep.subr.mxu0 0.0
  %52 = vmatpush1.msra.mxu0 %v25
  %53 = vmatprep.subr.mxu0 0.0
  %54 = vmatpush1.msra.mxu0 %v26
  %55 = vmatprep.subr.mxu0 0.0
  %56 = vmatpush1.msra.mxu0 %v27
  %57 = vmatprep.subr.mxu0 0.0
  %58 = vmatpush1.msra.mxu0 %v28
  %59 = vmatprep.subr.mxu0 0.0
  %60 = vmatpush1.msra.mxu0 %v29
  %61 = vmatprep.subr.mxu0 0.0
  %62 = vmatpush1.msra.mxu0 %v30
  %63 = vmatprep.subr.mxu0 0.0
  %64 = vmatpush1.msra.mxu0 %v31
  %65 = vmatprep.subr.mxu0 0.0
  %66 = vmatpush1.msra.mxu0 %v32
  %67 = vmatprep.subr.mxu0 0.0
  %68 = vmatpush1.msra.mxu0 %v33
  %69 = vmatprep.subr.mxu0 0.0
  %70 = vmatpush1.msra.mxu0 %v34
  %71 = vmatprep.subr.mxu0 0.0
  %72 = vmatpush1.msra.mxu0 %v35
  %73 = vmatprep.subr.mxu0 0.0
  %74 = vmatpush1.msra.mxu0 %v36
  %75 = vmatprep.subr.mxu0 0.0
  %76 = vmatpush1.msra.mxu0 %v37
  %77 = vmatprep.subr.mxu0 0.0
  %78 = vmatpush1.msra.mxu0 0.0
  %79 = vmatprep.subr.mxu0 0.0
  %80 = vmatpush1.msra.mxu0 0.0
  %81 = vmatprep.subr.mxu0 0.0
  %82 = vmatpush1.msra.mxu0 0.0
  %83 = vmatprep.subr.mxu0 0.0
  %84 = vmatpush1.msra.mxu0 0.0
  %85 = vmatprep.subr.mxu0 0.0
  %86 = vmatpush1.msra.mxu0 0.0
  %87 = vmatprep.subr.mxu0 0.0
  %88 = vmatpush1.msra.mxu0 0.0
  %89 = vmatprep.subr.mxu0 0.0
  %90 = vmatpush1.msra.mxu0 0.0
  %91 = vmatprep.subr.mxu0 0.0
  %92 = vmatpush1.msra.mxu0 0.0
  %93 = vmatprep.subr.mxu0 0.0
  %94 = vmatpush1.msra.mxu0 0.0
  %95 = vmatprep.subr.mxu0 0.0
  %96 = vmatpush1.msra.mxu0 0.0
  %97 = vmatprep.subr.mxu0 0.0
  %98 = vmatpush1.msra.mxu0 0.0
  %99 = vmatprep.subr.mxu0 0.0
  %100 = vmatpush1.msra.mxu0 0.0
  %101 = vmatprep.subr.mxu0 0.0
  %102 = vmatpush1.msra.mxu0 0.0
  %103 = vmatprep.subr.mxu0 0.0
  %104 = vmatpush1.msra.mxu0 0.0
  %105 = vmatprep.subr.mxu0 0.0
  %106 = vmatpush1.msra.mxu0 0.0
  %107 = vmatprep.subr.mxu0 0.0
  %108 = vmatpush1.msra.mxu0 0.0
  %109 = vmatprep.mubr.f32.mxu0 0.0
  %110 = vmatmul.mubr.f32.gmra.mrb[0].mxu0 %v14
  %v111 = vpop.f32.mrb[0].mxu0
  %v112 = vadd.f32 %v43, %v111
  %v113 = vpop.f32.mrb[0].mxu0
  %114 = vmatprep.mubr.f32.mxu0 0.0
  %115 = vmatmul.mubr.f32.gmra.mrb[0].mxu0 %v15
  %v116 = vpop.f32.mrb[0].mxu0
  %v117 = vadd.f32 %v43, %v116
  %v118 = vpop.f32.mrb[0].mxu0
  %119 = vmatprep.mubr.f32.mxu0 0.0
  %120 = vmatmul.mubr.f32.gmra.mrb[0].mxu0 %v16
  %v121 = vpop.f32.mrb[0].mxu0
  %v122 = vadd.f32 %v43, %v121
  %v123 = vpop.f32.mrb[0].mxu0
  %124 = vmatprep.mubr.f32.mxu0 0.0
  %125 = vmatmul.mubr.f32.gmra.mrb[0].mxu0 %v17
  %v126 = vpop.f32.mrb[0].mxu0
  %v127 = vadd.f32 %v43, %v126
  %v128 = vpop.f32.mrb[0].mxu0
  %129 = vmatprep.mubr.f32.mxu0 0.0
  %130 = vmatmul.mubr.f32.gmra.mrb[0].mxu0 %v18
  %v131 = vpop.f32.mrb[0].mxu0
  %v132 = vadd.f32 %v43, %v131
  %v133 = vpop.f32.mrb[0].mxu0
  %134 = vmatprep.mubr.f32.mxu0 0.0
  %135 = vmatmul.mubr.f32.gmra.mrb[0].mxu0 %v19
  %v136 = vpop.f32.mrb[0].mxu0
  %v137 = vadd.f32 %v43, %v136
  %v138 = vpop.f32.mrb[0].mxu0
  %139 = vmatprep.mubr.f32.mxu0 0.0
  %140 = vmatmul.mubr.f32.gmra.mrb[0].mxu0 %v20
  %v141 = vpop.f32.mrb[0].mxu0
  %v142 = vadd.f32 %v43, %v141
  %v143 = vpop.f32.mrb[0].mxu0
  %144 = vmatprep.mubr.f32.mxu0 0.0
  %145 = vmatmul.mubr.f32.gmra.mrb[0].mxu0 %v21
  %v146 = vpop.f32.mrb[0].mxu0
  %v147 = vadd.f32 %v43, %v146
  %v148 = vpop.f32.mrb[0].mxu0
  %149 = vdwg.mxu0
  %150 = vst [vmem:[%s3] sm:$0xff] %v112
  %151 = vst [vmem:[%s3 + $0x8] sm:$0xff] %v117
  %152 = vst [vmem:[%s3 + $0x10] sm:$0xff] %v122
  %153 = vst [vmem:[%s3 + $0x18] sm:$0xff] %v127
  %154 = vst [vmem:[%s3 + $0x20] sm:$0xff] %v132
  %155 = vst [vmem:[%s3 + $0x28] sm:$0xff] %v137
  %156 = vst [vmem:[%s3 + $0x30] sm:$0xff] %v142
  %157 = vst [vmem:[%s3 + $0x38] sm:$0xff] %v147
  // Predicated region
  $region14: #{rnn_forward.2} parent=0 // pred_check
    _
  $region15: #{rnn_forward.2} parent=0 // pred_check_branch
    %159 = sbr.rel (0) target = $region17
  $region16: #{rnn_forward.2} parent=0 // pred_region
    _
  $region17: #{rnn_forward.2} parent=0 // pred_fallthru
    _
  // Predicated region
  $region18: #{rnn_forward.2} parent=0 // pred_check
    _
  $region19: #{rnn_forward.2} parent=0 // pred_check_branch
    %161 = sbr.rel (0) target = $region21
  $region20: #{rnn_forward.2} parent=0 // pred_region
    _
  $region21: #{rnn_forward.2} parent=0 // pred_fallthru
    _

// kernel: rnn_forward.3
$region0: #{rnn_forward.3}
  #allocation0 [shape = 'u32[]', space=smem, size = 0x4, offset = 0x4, fixed_abs, tag = 'smem constant byte address 0x4 - core index']
  #allocation1 [shape = 'u32[144,128]{1,0:T(1,128)}', space=vmem, size = 0x12000, scoped, tag = 'internal scratch']
  #allocation2 [shape = 'f32[128,128]{1,0:T(8,128)}', space=vmem, size = 0x10000, scoped, tag = 'scratch operand']
  #allocation3 [shape = 'f32[8,128]{1,0:T(8,128)}', space=vmem, size = 0x1000, scoped, tag = 'scratch operand']
  #allocation4 [shape = 's32[1]{0}', space=sflag, size = 0x4, scoped, tag = 'scratch operand']
  #allocation5 [shape = 's32[]', space=sflag, size = 0x4, offset = 0, fixed_abs, tag = 'sflag constant byte address 0x0 - dummy sync flag']
  %s0 = inlined_call_operand.vmem [shape: f32[8,8,128], index: 0, kind: input, shape index: {}]
  %s1 = inlined_call_operand.vmem [shape: f32[128,128], index: 1, kind: input, shape index: {}]
  %s2 = inlined_call_operand.vmem [shape: f32[128,128], index: 2, kind: input, shape index: {}]
  %s3 = inlined_call_operand.vmem [shape: f32[1,128], index: 3, kind: input, shape index: {}]
  %s4 = inlined_call_operand.vmem [shape: f32[8,128], index: 4, kind: output, shape index: {}]
  %s5 = sld [smem:[#allocation0]]
  $region64: #{rnn_forward.3} parent=0
    _
  %s7 = ssub.s32 1, %s5
  %s8 = scalar_select 0, %s7, %s5
  // Predicated region
  $region2: #{rnn_forward.3} parent=0 // pred_check
    _
  $region3: #{rnn_forward.3} parent=0 // pred_check_branch
    %10 = sbr.rel (0) target = $region5
  $region4: #{rnn_forward.3} parent=0 // pred_region
    _
  $region5: #{rnn_forward.3} parent=0 // pred_fallthru
    _
  // Predicated region
  $region6: #{rnn_forward.3} parent=0 // pred_check
    _
  $region7: #{rnn_forward.3} parent=0 // pred_check_branch
    %12 = sbr.rel (0) target = $region9
  $region8: #{rnn_forward.3} parent=0 // pred_region
    _
  $region9: #{rnn_forward.3} parent=0 // pred_fallthru
    _
  // Predicated region
  $region10: #{rnn_forward.3} parent=0 // pred_check
    _
  $region11: #{rnn_forward.3} parent=0 // pred_check_branch
    %14 = sbr.rel (0) target = $region13
  $region12: #{rnn_forward.3} parent=0 // pred_region
    _
  $region13: #{rnn_forward.3} parent=0 // pred_fallthru
    _
  %p15 = scmp.eq.s32.totalorder 0, 0
  // Predicated region
  $region14: #{rnn_forward.3} parent=0 // pred_check
    %p16 = pneg %p15
  $region15: #{rnn_forward.3} parent=0 // pred_check_branch
    %18 = sbr.rel (%p16) target = $region17
  $region16: #{rnn_forward.3} parent=0 // pred_region
    %p20 = scmp.lt.u32.totalorder 128, 8
    %p21 = pneg %p20
    // Predicated region
    $region18: #{rnn_forward.3} parent=16 // pred_check
      _
    $region19: #{rnn_forward.3} parent=16 // pred_check_branch
      %23 = sbr.rel (%p20) target = $region21
    $region20: #{rnn_forward.3} parent=16 // pred_region
      %s38 = sand.u32 128, 7
      %p39 = scmp.eq.s32.totalorder %s38, 0
      // Predicated region
      $region33: #{rnn_forward.3} parent=20 // pred_check
        %p40 = pneg %p39
      $region34: #{rnn_forward.3} parent=20 // pred_check_branch
        %42 = sbr.rel (%p40) target = $region36
      $region35: #{rnn_forward.3} parent=20 // pred_region
        loop: start=0, step=1, limit=1
        $region37: #{rnn_forward.3} parent=35 // loop_pre_header
          _
        $region38: #{rnn_forward.3} parent=35 // loop_header
          %s44 = sphi 0, %s48
          %p45 = scmp.ge.s32.totalorder %s44, 1
          %s49 = sphi %s1, %s1
          %s50 = sphi [#allocation2], [#allocation2]
        $region39: #{rnn_forward.3} parent=35 // loop_header_branch
          %47 = sbr.rel (%p45) target = $region43
        $region40: #{rnn_forward.3} parent=35 // loop_body
          %v51 = vld [vmem:[%s49] sm:$0xff]
          %52 = vst [vmem:[%s50] sm:$0xff] %v51
          %v53 = vld [vmem:[%s49 + $0x8] sm:$0xff]
          %54 = vst [vmem:[%s50 + $0x8] sm:$0xff] %v53
          %v55 = vld [vmem:[%s49 + $0x10] sm:$0xff]
          %56 = vst [vmem:[%s50 + $0x10] sm:$0xff] %v55
          %v57 = vld [vmem:[%s49 + $0x18] sm:$0xff]
          %58 = vst [vmem:[%s50 + $0x18] sm:$0xff] %v57
          %v59 = vld [vmem:[%s49 + $0x20] sm:$0xff]
          %60 = vst [vmem:[%s50 + $0x20] sm:$0xff] %v59
          %v61 = vld [vmem:[%s49 + $0x28] sm:$0xff]
          %62 = vst [vmem:[%s50 + $0x28] sm:$0xff] %v61
          %v63 = vld [vmem:[%s49 + $0x30] sm:$0xff]
          %64 = vst [vmem:[%s50 + $0x30] sm:$0xff] %v63
          %v65 = vld [vmem:[%s49 + $0x38] sm:$0xff]
          %66 = vst [vmem:[%s50 + $0x38] sm:$0xff] %v65
          %v67 = vld [vmem:[%s49 + $0x40] sm:$0xff]
          %68 = vst [vmem:[%s50 + $0x40] sm:$0xff] %v67
          %v69 = vld [vmem:[%s49 + $0x48] sm:$0xff]
          %70 = vst [vmem:[%s50 + $0x48] sm:$0xff] %v69
          %v71 = vld [vmem:[%s49 + $0x50] sm:$0xff]
          %72 = vst [vmem:[%s50 + $0x50] sm:$0xff] %v71
          %v73 = vld [vmem:[%s49 + $0x58] sm:$0xff]
          %74 = vst [vmem:[%s50 + $0x58] sm:$0xff] %v73
          %v75 = vld [vmem:[%s49 + $0x60] sm:$0xff]
          %76 = vst [vmem:[%s50 + $0x60] sm:$0xff] %v75
          %v77 = vld [vmem:[%s49 + $0x68] sm:$0xff]
          %78 = vst [vmem:[%s50 + $0x68] sm:$0xff] %v77
          %v79 = vld [vmem:[%s49 + $0x70] sm:$0xff]
          %80 = vst [vmem:[%s50 + $0x70] sm:$0xff] %v79
          %v81 = vld [vmem:[%s49 + $0x78] sm:$0xff]
          %82 = vst [vmem:[%s50 + $0x78] sm:$0xff] %v81
        $region41: #{rnn_forward.3} parent=35 // loop_footer
          %s48 = sadd.s32 1, %s44
        $region42: #{rnn_forward.3} parent=35 // loop_footer_branch
          %43 = sbr.rel target = $region38
        $region43: #{rnn_forward.3} parent=35 // loop_exit
          _
      $region36: #{rnn_forward.3} parent=20 // pred_fallthru
        _
      %p83 = pneg %p39
      // Predicated region
      $region44: #{rnn_forward.3} parent=20 // pred_check
        _
      $region45: #{rnn_forward.3} parent=20 // pred_check_branch
        %85 = sbr.rel (%p39) target = $region47
      $region46: #{rnn_forward.3} parent=20 // pred_region
        %s86 = sand.u32 128, 7
      $region47: #{rnn_forward.3} parent=20 // pred_fallthru
        _
    $region21: #{rnn_forward.3} parent=16 // pred_fallthru
      _
    // Predicated region
    $region22: #{rnn_forward.3} parent=16 // pred_check
      %p24 = pneg %p20
    $region23: #{rnn_forward.3} parent=16 // pred_check_branch
      %26 = sbr.rel (%p24) target = $region25
    $region24: #{rnn_forward.3} parent=16 // pred_region
      %s27 = sshllo.u32 0, 128
      loop: start=0, step=1, limit=1
      $region26: #{rnn_forward.3} parent=24 // loop_pre_header
        _
      $region27: #{rnn_forward.3} parent=24 // loop_header
        %s29 = sphi 0, %s33
        %p30 = scmp.ge.s32.totalorder %s29, 1
        %s34 = sphi %s1, %s1
        %s35 = sphi [#allocation2], [#allocation2]
      $region28: #{rnn_forward.3} parent=24 // loop_header_branch
        %32 = sbr.rel (%p30) target = $region32
      $region29: #{rnn_forward.3} parent=24 // loop_body
        %v36 = vld [vmem:[%s34] sm:%s27]
        %37 = vst [vmem:[%s35] sm:%s27] %v36
      $region30: #{rnn_forward.3} parent=24 // loop_footer
        %s33 = sadd.s32 1, %s29
      $region31: #{rnn_forward.3} parent=24 // loop_footer_branch
        %28 = sbr.rel target = $region27
      $region32: #{rnn_forward.3} parent=24 // loop_exit
        _
    $region25: #{rnn_forward.3} parent=16 // pred_fallthru
      _
    // Predicated region
    $region48: #{rnn_forward.3} parent=16 // pred_check
      _
    $region49: #{rnn_forward.3} parent=16 // pred_check_branch
      %89 = sbr.rel (0) target = $region51
    $region50: #{rnn_forward.3} parent=16 // pred_region
      %90 = vsyncadd [#allocation4], 2048
    $region51: #{rnn_forward.3} parent=16 // pred_fallthru
      _
    %s91 = smul.u32 128, 1
    %s92 = sshll.u32 %s91, 4
    %93 = dma.done [#allocation4], %s92
    %94 = vst [vmem:[#allocation3] sm:$0xff] 0.0
  $region17: #{rnn_forward.3} parent=0 // pred_fallthru
    _
  %v95 = vld [vmem:[#allocation2] sm:$0xff]
  %v96 = vld [vmem:[#allocation2 + $0x8] sm:$0xff]
  %v97 = vld [vmem:[#allocation2 + $0x10] sm:$0xff]
  %v98 = vld [vmem:[#allocation2 + $0x18] sm:$0xff]
  %v99 = vld [vmem:[#allocation2 + $0x20] sm:$0xff]
  %v100 = vld [vmem:[#allocation2 + $0x28] sm:$0xff]
  %v101 = vld [vmem:[#allocation2 + $0x30] sm:$0xff]
  %v102 = vld [vmem:[#allocation2 + $0x38] sm:$0xff]
  %v103 = vld [vmem:[#allocation2 + $0x40] sm:$0xff]
  %v104 = vld [vmem:[#allocation2 + $0x48] sm:$0xff]
  %v105 = vld [vmem:[#allocation2 + $0x50] sm:$0xff]
  %v106 = vld [vmem:[#allocation2 + $0x58] sm:$0xff]
  %v107 = vld [vmem:[#allocation2 + $0x60] sm:$0xff]
  %v108 = vld [vmem:[#allocation2 + $0x68] sm:$0xff]
  %v109 = vld [vmem:[#allocation2 + $0x70] sm:$0xff]
  %v110 = vld [vmem:[#allocation2 + $0x78] sm:$0xff]
  %v111 = vld [vmem:[#allocation3] sm:$0xff]
  %v112 = vld [vmem:[%s0] sm:$0x1]
  %v113 = vld [vmem:[%s0 + $0x8] sm:$0x1]
  %v114 = vld [vmem:[%s0 + $0x10] sm:$0x1]
  %v115 = vld [vmem:[%s0 + $0x18] sm:$0x1]
  %v116 = vld [vmem:[%s0 + $0x20] sm:$0x1]
  %v117 = vld [vmem:[%s0 + $0x28] sm:$0x1]
  %v118 = vld [vmem:[%s0 + $0x30] sm:$0x1]
  %v119 = vld [vmem:[%s0 + $0x38] sm:$0x1]
  %120 = vmatprep.subr.mxu0 0.0
  %121 = vmatpush1.msra.mxu0 %v95
  %122 = vmatprep.subr.mxu0 0.0
  %123 = vmatpush1.msra.mxu0 %v96
  %124 = vmatprep.subr.mxu0 0.0
  %125 = vmatpush1.msra.mxu0 %v97
  %126 = vmatprep.subr.mxu0 0.0
  %127 = vmatpush1.msra.mxu0 %v98
  %128 = vmatprep.subr.mxu0 0.0
  %129 = vmatpush1.msra.mxu0 %v99
  %130 = vmatprep.subr.mxu0 0.0
  %131 = vmatpush1.msra.mxu0 %v100
  %132 = vmatprep.subr.mxu0 0.0
  %133 = vmatpush1.msra.mxu0 %v101
  %134 = vmatprep.subr.mxu0 0.0
  %135 = vmatpush1.msra.mxu0 %v102
  %136 = vmatprep.subr.mxu0 0.0
  %137 = vmatpush1.msra.mxu0 %v103
  %138 = vmatprep.subr.mxu0 0.0
  %139 = vmatpush1.msra.mxu0 %v104
  %140 = vmatprep.subr.mxu0 0.0
  %141 = vmatpush1.msra.mxu0 %v105
  %142 = vmatprep.subr.mxu0 0.0
  %143 = vmatpush1.msra.mxu0 %v106
  %144 = vmatprep.subr.mxu0 0.0
  %145 = vmatpush1.msra.mxu0 %v107
  %146 = vmatprep.subr.mxu0 0.0
  %147 = vmatpush1.msra.mxu0 %v108
  %148 = vmatprep.subr.mxu0 0.0
  %149 = vmatpush1.msra.mxu0 %v109
  %150 = vmatprep.subr.mxu0 0.0
  %151 = vmatpush1.msra.mxu0 %v110
  %152 = vmatprep.subr.mxu0 0.0
  %153 = vmatpush1.msra.mxu0 0.0
  %154 = vmatprep.subr.mxu0 0.0
  %155 = vmatpush1.msra.mxu0 0.0
  %156 = vmatprep.subr.mxu0 0.0
  %157 = vmatpush1.msra.mxu0 0.0
  %158 = vmatprep.subr.mxu0 0.0
  %159 = vmatpush1.msra.mxu0 0.0
  %160 = vmatprep.subr.mxu0 0.0
  %161 = vmatpush1.msra.mxu0 0.0
  %162 = vmatprep.subr.mxu0 0.0
  %163 = vmatpush1.msra.mxu0 0.0
  %164 = vmatprep.subr.mxu0 0.0
  %165 = vmatpush1.msra.mxu0 0.0
  %166 = vmatprep.subr.mxu0 0.0
  %167 = vmatpush1.msra.mxu0 0.0
  %168 = vmatprep.subr.mxu0 0.0
  %169 = vmatpush1.msra.mxu0 0.0
  %170 = vmatprep.subr.mxu0 0.0
  %171 = vmatpush1.msra.mxu0 0.0
  %172 = vmatprep.subr.mxu0 0.0
  %173 = vmatpush1.msra.mxu0 0.0
  %174 = vmatprep.subr.mxu0 0.0
  %175 = vmatpush1.msra.mxu0 0.0
  %176 = vmatprep.subr.mxu0 0.0
  %177 = vmatpush1.msra.mxu0 0.0
  %178 = vmatprep.subr.mxu0 0.0
  %179 = vmatpush1.msra.mxu0 0.0
  %180 = vmatprep.subr.mxu0 0.0
  %181 = vmatpush1.msra.mxu0 0.0
  %182 = vmatprep.subr.mxu0 0.0
  %183 = vmatpush1.msra.mxu0 0.0
  %184 = vmatprep.mubr.f32.mxu0 0.0
  %185 = vmatmul.mubr.f32.gmra.mrb[0].mxu0 %v111
  %v186 = vpop.f32.mrb[0].mxu0
  %v187 = vadd.f32 0.0, %v186
  %v188 = vpop.f32.mrb[0].mxu0
  %189 = vdwg.mxu0
  %v191 = vrot.slane %v187, 1
  %v192 = vrot.slane %v187, 2
  %v193 = vrot.slane %v187, 3
  %v194 = vrot.slane %v187, 4
  %v195 = vrot.slane %v187, 5
  %v196 = vrot.slane %v187, 6
  %v197 = vrot.slane %v187, 7
  %v206 = vadd.f32 %v112, %v187
  %v207 = vadd.f32 %v113, %v191
  %v208 = vadd.f32 %v114, %v192
  %v209 = vadd.f32 %v115, %v193
  %v210 = vadd.f32 %v116, %v194
  %v211 = vadd.f32 %v117, %v195
  %v212 = vadd.f32 %v118, %v196
  %v213 = vadd.f32 %v119, %v197
  %v214 = vtanh.pop %v206
  %v215 = vtanh.pop %v207
  %v216 = vtanh.pop %v208
  %v217 = vtanh.pop %v209
  %v218 = vtanh.pop %v210
  %v219 = vtanh.pop %v211
  %v220 = vtanh.pop %v212
  %v221 = vtanh.pop %v213
  %v222 = vld [vmem:[%s0 + $0x1] sm:$0x1]
  %v223 = vld [vmem:[%s0 + $0x9] sm:$0x1]
  %v224 = vld [vmem:[%s0 + $0x11] sm:$0x1]
  %v225 = vld [vmem:[%s0 + $0x19] sm:$0x1]
  %v226 = vld [vmem:[%s0 + $0x21] sm:$0x1]
  %v227 = vld [vmem:[%s0 + $0x29] sm:$0x1]
  %v228 = vld [vmem:[%s0 + $0x31] sm:$0x1]
  %v229 = vld [vmem:[%s0 + $0x39] sm:$0x1]
  %v238 = vrot.slane %v215, 7
  %vm239 = vcmask 1041409
  %v240 = vsel %vm239, %v238, %v214
  %v241 = vrot.slane %v216, 6
  %vm242 = vcmask 1042434
  %v243 = vsel %vm242, %v241, %v240
  %v244 = vrot.slane %v217, 5
  %vm245 = vcmask 1043459
  %v246 = vsel %vm245, %v244, %v243
  %v247 = vrot.slane %v218, 4
  %vm248 = vcmask 1044484
  %v249 = vsel %vm248, %v247, %v246
  %v250 = vrot.slane %v219, 3
  %vm251 = vcmask 1045509
  %v252 = vsel %vm251, %v250, %v249
  %v253 = vrot.slane %v220, 2
  %vm254 = vcmask 1046534
  %v255 = vsel %vm254, %v253, %v252
  %v256 = vrot.slane %v221, 1
  %vm257 = vcmask 1047559
  %v258 = vsel %vm257, %v256, %v255
  %260 = vmatprep.subr.mxu0 0.0
  %261 = vmatpush1.msra.mxu0 %v95
  %262 = vmatprep.subr.mxu0 0.0
  %263 = vmatpush1.msra.mxu0 %v96
  %264 = vmatprep.subr.mxu0 0.0
  %265 = vmatpush1.msra.mxu0 %v97
  %266 = vmatprep.subr.mxu0 0.0
  %267 = vmatpush1.msra.mxu0 %v98
  %268 = vmatprep.subr.mxu0 0.0
  %269 = vmatpush1.msra.mxu0 %v99
  %270 = vmatprep.subr.mxu0 0.0
  %271 = vmatpush1.msra.mxu0 %v100
  %272 = vmatprep.subr.mxu0 0.0
  %273 = vmatpush1.msra.mxu0 %v101
  %274 = vmatprep.subr.mxu0 0.0
  %275 = vmatpush1.msra.mxu0 %v102
  %276 = vmatprep.subr.mxu0 0.0
  %277 = vmatpush1.msra.mxu0 %v103
  %278 = vmatprep.subr.mxu0 0.0
  %279 = vmatpush1.msra.mxu0 %v104
  %280 = vmatprep.subr.mxu0 0.0
  %281 = vmatpush1.msra.mxu0 %v105
  %282 = vmatprep.subr.mxu0 0.0
  %283 = vmatpush1.msra.mxu0 %v106
  %284 = vmatprep.subr.mxu0 0.0
  %285 = vmatpush1.msra.mxu0 %v107
  %286 = vmatprep.subr.mxu0 0.0
  %287 = vmatpush1.msra.mxu0 %v108
  %288 = vmatprep.subr.mxu0 0.0
  %289 = vmatpush1.msra.mxu0 %v109
  %290 = vmatprep.subr.mxu0 0.0
  %291 = vmatpush1.msra.mxu0 %v110
  %292 = vmatprep.subr.mxu0 0.0
  %293 = vmatpush1.msra.mxu0 0.0
  %294 = vmatprep.subr.mxu0 0.0
  %295 = vmatpush1.msra.mxu0 0.0
  %296 = vmatprep.subr.mxu0 0.0
  %297 = vmatpush1.msra.mxu0 0.0
  %298 = vmatprep.subr.mxu0 0.0
  %299 = vmatpush1.msra.mxu0 0.0
  %300 = vmatprep.subr.mxu0 0.0
  %301 = vmatpush1.msra.mxu0 0.0
  %302 = vmatprep.subr.mxu0 0.0
  %303 = vmatpush1.msra.mxu0 0.0
  %304 = vmatprep.subr.mxu0 0.0
  %305 = vmatpush1.msra.mxu0 0.0
  %306 = vmatprep.subr.mxu0 0.0
  %307 = vmatpush1.msra.mxu0 0.0
  %308 = vmatprep.subr.mxu0 0.0
  %309 = vmatpush1.msra.mxu0 0.0
  %310 = vmatprep.subr.mxu0 0.0
  %311 = vmatpush1.msra.mxu0 0.0
  %312 = vmatprep.subr.mxu0 0.0
  %313 = vmatpush1.msra.mxu0 0.0
  %314 = vmatprep.subr.mxu0 0.0
  %315 = vmatpush1.msra.mxu0 0.0
  %316 = vmatprep.subr.mxu0 0.0
  %317 = vmatpush1.msra.mxu0 0.0
  %318 = vmatprep.subr.mxu0 0.0
  %319 = vmatpush1.msra.mxu0 0.0
  %320 = vmatprep.subr.mxu0 0.0
  %321 = vmatpush1.msra.mxu0 0.0
  %322 = vmatprep.subr.mxu0 0.0
  %323 = vmatpush1.msra.mxu0 0.0
  %324 = vmatprep.mubr.f32.mxu0 0.0
  %325 = vmatmul.mubr.f32.gmra.mrb[0].mxu0 %v258
  %v326 = vpop.f32.mrb[0].mxu0
  %v327 = vadd.f32 0.0, %v326
  %v328 = vpop.f32.mrb[0].mxu0
  %329 = vdwg.mxu0
  %v331 = vrot.slane %v327, 1
  %v332 = vrot.slane %v327, 2
  %v333 = vrot.slane %v327, 3
  %v334 = vrot.slane %v327, 4
  %v335 = vrot.slane %v327, 5
  %v336 = vrot.slane %v327, 6
  %v337 = vrot.slane %v327, 7
  %v346 = vadd.f32 %v222, %v327
  %v347 = vadd.f32 %v223, %v331
  %v348 = vadd.f32 %v224, %v332
  %v349 = vadd.f32 %v225, %v333
  %v350 = vadd.f32 %v226, %v334
  %v351 = vadd.f32 %v227, %v335
  %v352 = vadd.f32 %v228, %v336
  %v353 = vadd.f32 %v229, %v337
  %v354 = vtanh.pop %v346
  %v355 = vtanh.pop %v347
  %v356 = vtanh.pop %v348
  %v357 = vtanh.pop %v349
  %v358 = vtanh.pop %v350
  %v359 = vtanh.pop %v351
  %v360 = vtanh.pop %v352
  %v361 = vtanh.pop %v353
  %v362 = vld [vmem:[%s0 + $0x2] sm:$0x1]
  %v363 = vld [vmem:[%s0 + $0xa] sm:$0x1]
  %v364 = vld [vmem:[%s0 + $0x12] sm:$0x1]
  %v365 = vld [vmem:[%s0 + $0x1a] sm:$0x1]
  %v366 = vld [vmem:[%s0 + $0x22] sm:$0x1]
  %v367 = vld [vmem:[%s0 + $0x2a] sm:$0x1]
  %v368 = vld [vmem:[%s0 + $0x32] sm:$0x1]
  %v369 = vld [vmem:[%s0 + $0x3a] sm:$0x1]
  %v378 = vrot.slane %v355, 7
  %v379 = vsel %vm239, %v378, %v354
  %v380 = vrot.slane %v356, 6
  %v381 = vsel %vm242, %v380, %v379
  %v382 = vrot.slane %v357, 5
  %v383 = vsel %vm245, %v382, %v381
  %v384 = vrot.slane %v358, 4
  %v385 = vsel %vm248, %v384, %v383
  %v386 = vrot.slane %v359, 3
  %v387 = vsel %vm251, %v386, %v385
  %v388 = vrot.slane %v360, 2
  %v389 = vsel %vm254, %v388, %v387
  %v390 = vrot.slane %v361, 1
  %v391 = vsel %vm257, %v390, %v389
  %393 = vmatprep.subr.mxu0 0.0
  %394 = vmatpush1.msra.mxu0 %v95
  %395 = vmatprep.subr.mxu0 0.0
  %396 = vmatpush1.msra.mxu0 %v96
  %397 = vmatprep.subr.mxu0 0.0
  %398 = vmatpush1.msra.mxu0 %v97
  %399 = vmatprep.subr.mxu0 0.0
  %400 = vmatpush1.msra.mxu0 %v98
  %401 = vmatprep.subr.mxu0 0.0
  %402 = vmatpush1.msra.mxu0 %v99
  %403 = vmatprep.subr.mxu0 0.0
  %404 = vmatpush1.msra.mxu0 %v100
  %405 = vmatprep.subr.mxu0 0.0
  %406 = vmatpush1.msra.mxu0 %v101
  %407 = vmatprep.subr.mxu0 0.0
  %408 = vmatpush1.msra.mxu0 %v102
  %409 = vmatprep.subr.mxu0 0.0
  %410 = vmatpush1.msra.mxu0 %v103
  %411 = vmatprep.subr.mxu0 0.0
  %412 = vmatpush1.msra.mxu0 %v104
  %413 = vmatprep.subr.mxu0 0.0
  %414 = vmatpush1.msra.mxu0 %v105
  %415 = vmatprep.subr.mxu0 0.0
  %416 = vmatpush1.msra.mxu0 %v106
  %417 = vmatprep.subr.mxu0 0.0
  %418 = vmatpush1.msra.mxu0 %v107
  %419 = vmatprep.subr.mxu0 0.0
  %420 = vmatpush1.msra.mxu0 %v108
  %421 = vmatprep.subr.mxu0 0.0
  %422 = vmatpush1.msra.mxu0 %v109
  %423 = vmatprep.subr.mxu0 0.0
  %424 = vmatpush1.msra.mxu0 %v110
  %425 = vmatprep.subr.mxu0 0.0
  %426 = vmatpush1.msra.mxu0 0.0
  %427 = vmatprep.subr.mxu0 0.0
  %428 = vmatpush1.msra.mxu0 0.0
  %429 = vmatprep.subr.mxu0 0.0
  %430 = vmatpush1.msra.mxu0 0.0
  %431 = vmatprep.subr.mxu0 0.0
  %432 = vmatpush1.msra.mxu0 0.0
  %433 = vmatprep.subr.mxu0 0.0
  %434 = vmatpush1.msra.mxu0 0.0
  %435 = vmatprep.subr.mxu0 0.0
  %436 = vmatpush1.msra.mxu0 0.0
  %437 = vmatprep.subr.mxu0 0.0
  %438 = vmatpush1.msra.mxu0 0.0
  %439 = vmatprep.subr.mxu0 0.0
  %440 = vmatpush1.msra.mxu0 0.0
  %441 = vmatprep.subr.mxu0 0.0
  %442 = vmatpush1.msra.mxu0 0.0
  %443 = vmatprep.subr.mxu0 0.0
  %444 = vmatpush1.msra.mxu0 0.0
  %445 = vmatprep.subr.mxu0 0.0
  %446 = vmatpush1.msra.mxu0 0.0
  %447 = vmatprep.subr.mxu0 0.0
  %448 = vmatpush1.msra.mxu0 0.0
  %449 = vmatprep.subr.mxu0 0.0
  %450 = vmatpush1.msra.mxu0 0.0
  %451 = vmatprep.subr.mxu0 0.0
  %452 = vmatpush1.msra.mxu0 0.0
  %453 = vmatprep.subr.mxu0 0.0
  %454 = vmatpush1.msra.mxu0 0.0
  %455 = vmatprep.subr.mxu0 0.0
  %456 = vmatpush1.msra.mxu0 0.0
  %457 = vmatprep.mubr.f32.mxu0 0.0
  %458 = vmatmul.mubr.f32.gmra.mrb[0].mxu0 %v391
  %v459 = vpop.f32.mrb[0].mxu0
  %v460 = vadd.f32 0.0, %v459
  %v461 = vpop.f32.mrb[0].mxu0
  %462 = vdwg.mxu0
  %v464 = vrot.slane %v460, 1
  %v465 = vrot.slane %v460, 2
  %v466 = vrot.slane %v460, 3
  %v467 = vrot.slane %v460, 4
  %v468 = vrot.slane %v460, 5
  %v469 = vrot.slane %v460, 6
  %v470 = vrot.slane %v460, 7
  %v479 = vadd.f32 %v362, %v460
  %v480 = vadd.f32 %v363, %v464
  %v481 = vadd.f32 %v364, %v465
  %v482 = vadd.f32 %v365, %v466
  %v483 = vadd.f32 %v366, %v467
  %v484 = vadd.f32 %v367, %v468
  %v485 = vadd.f32 %v368, %v469
  %v486 = vadd.f32 %v369, %v470
  %v487 = vtanh.pop %v479
  %v488 = vtanh.pop %v480
  %v489 = vtanh.pop %v481
  %v490 = vtanh.pop %v482
  %v491 = vtanh.pop %v483
  %v492 = vtanh.pop %v484
  %v493 = vtanh.pop %v485
  %v494 = vtanh.pop %v486
  %v495 = vld [vmem:[%s0 + $0x3] sm:$0x1]
  %v496 = vld [vmem:[%s0 + $0xb] sm:$0x1]
  %v497 = vld [vmem:[%s0 + $0x13] sm:$0x1]
  %v498 = vld [vmem:[%s0 + $0x1b] sm:$0x1]
  %v499 = vld [vmem:[%s0 + $0x23] sm:$0x1]
  %v500 = vld [vmem:[%s0 + $0x2b] sm:$0x1]
  %v501 = vld [vmem:[%s0 + $0x33] sm:$0x1]
  %v502 = vld [vmem:[%s0 + $0x3b] sm:$0x1]
  %v511 = vrot.slane %v488, 7
  %v512 = vsel %vm239, %v511, %v487
  %v513 = vrot.slane %v489, 6
  %v514 = vsel %vm242, %v513, %v512
  %v515 = vrot.slane %v490, 5
  %v516 = vsel %vm245, %v515, %v514
  %v517 = vrot.slane %v491, 4
  %v518 = vsel %vm248, %v517, %v516
  %v519 = vrot.slane %v492, 3
  %v520 = vsel %vm251, %v519, %v518
  %v521 = vrot.slane %v493, 2
  %v522 = vsel %vm254, %v521, %v520
  %v523 = vrot.slane %v494, 1
  %v524 = vsel %vm257, %v523, %v522
  %526 = vmatprep.subr.mxu0 0.0
  %527 = vmatpush1.msra.mxu0 %v95
  %528 = vmatprep.subr.mxu0 0.0
  %529 = vmatpush1.msra.mxu0 %v96
  %530 = vmatprep.subr.mxu0 0.0
  %531 = vmatpush1.msra.mxu0 %v97
  %532 = vmatprep.subr.mxu0 0.0
  %533 = vmatpush1.msra.mxu0 %v98
  %534 = vmatprep.subr.mxu0 0.0
  %535 = vmatpush1.msra.mxu0 %v99
  %536 = vmatprep.subr.mxu0 0.0
  %537 = vmatpush1.msra.mxu0 %v100
  %538 = vmatprep.subr.mxu0 0.0
  %539 = vmatpush1.msra.mxu0 %v101
  %540 = vmatprep.subr.mxu0 0.0
  %541 = vmatpush1.msra.mxu0 %v102
  %542 = vmatprep.subr.mxu0 0.0
  %543 = vmatpush1.msra.mxu0 %v103
  %544 = vmatprep.subr.mxu0 0.0
  %545 = vmatpush1.msra.mxu0 %v104
  %546 = vmatprep.subr.mxu0 0.0
  %547 = vmatpush1.msra.mxu0 %v105
  %548 = vmatprep.subr.mxu0 0.0
  %549 = vmatpush1.msra.mxu0 %v106
  %550 = vmatprep.subr.mxu0 0.0
  %551 = vmatpush1.msra.mxu0 %v107
  %552 = vmatprep.subr.mxu0 0.0
  %553 = vmatpush1.msra.mxu0 %v108
  %554 = vmatprep.subr.mxu0 0.0
  %555 = vmatpush1.msra.mxu0 %v109
  %556 = vmatprep.subr.mxu0 0.0
  %557 = vmatpush1.msra.mxu0 %v110
  %558 = vmatprep.subr.mxu0 0.0
  %559 = vmatpush1.msra.mxu0 0.0
  %560 = vmatprep.subr.mxu0 0.0
  %561 = vmatpush1.msra.mxu0 0.0
  %562 = vmatprep.subr.mxu0 0.0
  %563 = vmatpush1.msra.mxu0 0.0
  %564 = vmatprep.subr.mxu0 0.0
  %565 = vmatpush1.msra.mxu0 0.0
  %566 = vmatprep.subr.mxu0 0.0
  %567 = vmatpush1.msra.mxu0 0.0
  %568 = vmatprep.subr.mxu0 0.0
  %569 = vmatpush1.msra.mxu0 0.0
  %570 = vmatprep.subr.mxu0 0.0
  %571 = vmatpush1.msra.mxu0 0.0
  %572 = vmatprep.subr.mxu0 0.0
  %573 = vmatpush1.msra.mxu0 0.0
  %574 = vmatprep.subr.mxu0 0.0
  %575 = vmatpush1.msra.mxu0 0.0
  %576 = vmatprep.subr.mxu0 0.0
  %577 = vmatpush1.msra.mxu0 0.0
  %578 = vmatprep.subr.mxu0 0.0
  %579 = vmatpush1.msra.mxu0 0.0
  %580 = vmatprep.subr.mxu0 0.0
  %581 = vmatpush1.msra.mxu0 0.0
  %582 = vmatprep.subr.mxu0 0.0
  %583 = vmatpush1.msra.mxu0 0.0
  %584 = vmatprep.subr.mxu0 0.0
  %585 = vmatpush1.msra.mxu0 0.0
  %586 = vmatprep.subr.mxu0 0.0
  %587 = vmatpush1.msra.mxu0 0.0
  %588 = vmatprep.subr.mxu0 0.0
  %589 = vmatpush1.msra.mxu0 0.0
  %590 = vmatprep.mubr.f32.mxu0 0.0
  %591 = vmatmul.mubr.f32.gmra.mrb[0].mxu0 %v524
  %v592 = vpop.f32.mrb[0].mxu0
  %v593 = vadd.f32 0.0, %v592
  %v594 = vpop.f32.mrb[0].mxu0
  %595 = vdwg.mxu0
  %v597 = vrot.slane %v593, 1
  %v598 = vrot.slane %v593, 2
  %v599 = vrot.slane %v593, 3
  %v600 = vrot.slane %v593, 4
  %v601 = vrot.slane %v593, 5
  %v602 = vrot.slane %v593, 6
  %v603 = vrot.slane %v593, 7
  %v612 = vadd.f32 %v495, %v593
  %v613 = vadd.f32 %v496, %v597
  %v614 = vadd.f32 %v497, %v598
  %v615 = vadd.f32 %v498, %v599
  %v616 = vadd.f32 %v499, %v600
  %v617 = vadd.f32 %v500, %v601
  %v618 = vadd.f32 %v501, %v602
  %v619 = vadd.f32 %v502, %v603
  %v620 = vtanh.pop %v612
  %v621 = vtanh.pop %v613
  %v622 = vtanh.pop %v614
  %v623 = vtanh.pop %v615
  %v624 = vtanh.pop %v616
  %v625 = vtanh.pop %v617
  %v626 = vtanh.pop %v618
  %v627 = vtanh.pop %v619
  %v628 = vld [vmem:[%s0 + $0x4] sm:$0x1]
  %v629 = vld [vmem:[%s0 + $0xc] sm:$0x1]
  %v630 = vld [vmem:[%s0 + $0x14] sm:$0x1]
  %v631 = vld [vmem:[%s0 + $0x1c] sm:$0x1]
  %v632 = vld [vmem:[%s0 + $0x24] sm:$0x1]
  %v633 = vld [vmem:[%s0 + $0x2c] sm:$0x1]
  %v634 = vld [vmem:[%s0 + $0x34] sm:$0x1]
  %v635 = vld [vmem:[%s0 + $0x3c] sm:$0x1]
  %v644 = vrot.slane %v621, 7
  %v645 = vsel %vm239, %v644, %v620
  %v646 = vrot.slane %v622, 6
  %v647 = vsel %vm242, %v646, %v645
  %v648 = vrot.slane %v623, 5
  %v649 = vsel %vm245, %v648, %v647
  %v650 = vrot.slane %v624, 4
  %v651 = vsel %vm248, %v650, %v649
  %v652 = vrot.slane %v625, 3
  %v653 = vsel %vm251, %v652, %v651
  %v654 = vrot.slane %v626, 2
  %v655 = vsel %vm254, %v654, %v653
  %v656 = vrot.slane %v627, 1
  %v657 = vsel %vm257, %v656, %v655
  %659 = vmatprep.subr.mxu0 0.0
  %660 = vmatpush1.msra.mxu0 %v95
  %661 = vmatprep.subr.mxu0 0.0
  %662 = vmatpush1.msra.mxu0 %v96
  %663 = vmatprep.subr.mxu0 0.0
  %664 = vmatpush1.msra.mxu0 %v97
  %665 = vmatprep.subr.mxu0 0.0
  %666 = vmatpush1.msra.mxu0 %v98
  %667 = vmatprep.subr.mxu0 0.0
  %668 = vmatpush1.msra.mxu0 %v99
  %669 = vmatprep.subr.mxu0 0.0
  %670 = vmatpush1.msra.mxu0 %v100
  %671 = vmatprep.subr.mxu0 0.0
  %672 = vmatpush1.msra.mxu0 %v101
  %673 = vmatprep.subr.mxu0 0.0
  %674 = vmatpush1.msra.mxu0 %v102
  %675 = vmatprep.subr.mxu0 0.0
  %676 = vmatpush1.msra.mxu0 %v103
  %677 = vmatprep.subr.mxu0 0.0
  %678 = vmatpush1.msra.mxu0 %v104
  %679 = vmatprep.subr.mxu0 0.0
  %680 = vmatpush1.msra.mxu0 %v105
  %681 = vmatprep.subr.mxu0 0.0
  %682 = vmatpush1.msra.mxu0 %v106
  %683 = vmatprep.subr.mxu0 0.0
  %684 = vmatpush1.msra.mxu0 %v107
  %685 = vmatprep.subr.mxu0 0.0
  %686 = vmatpush1.msra.mxu0 %v108
  %687 = vmatprep.subr.mxu0 0.0
  %688 = vmatpush1.msra.mxu0 %v109
  %689 = vmatprep.subr.mxu0 0.0
  %690 = vmatpush1.msra.mxu0 %v110
  %691 = vmatprep.subr.mxu0 0.0
  %692 = vmatpush1.msra.mxu0 0.0
  %693 = vmatprep.subr.mxu0 0.0
  %694 = vmatpush1.msra.mxu0 0.0
  %695 = vmatprep.subr.mxu0 0.0
  %696 = vmatpush1.msra.mxu0 0.0
  %697 = vmatprep.subr.mxu0 0.0
  %698 = vmatpush1.msra.mxu0 0.0
  %699 = vmatprep.subr.mxu0 0.0
  %700 = vmatpush1.msra.mxu0 0.0
  %701 = vmatprep.subr.mxu0 0.0
  %702 = vmatpush1.msra.mxu0 0.0
  %703 = vmatprep.subr.mxu0 0.0
  %704 = vmatpush1.msra.mxu0 0.0
  %705 = vmatprep.subr.mxu0 0.0
  %706 = vmatpush1.msra.mxu0 0.0
  %707 = vmatprep.subr.mxu0 0.0
  %708 = vmatpush1.msra.mxu0 0.0
  %709 = vmatprep.subr.mxu0 0.0
  %710 = vmatpush1.msra.mxu0 0.0
  %711 = vmatprep.subr.mxu0 0.0
  %712 = vmatpush1.msra.mxu0 0.0
  %713 = vmatprep.subr.mxu0 0.0
  %714 = vmatpush1.msra.mxu0 0.0
  %715 = vmatprep.subr.mxu0 0.0
  %716 = vmatpush1.msra.mxu0 0.0
  %717 = vmatprep.subr.mxu0 0.0
  %718 = vmatpush1.msra.mxu0 0.0
  %719 = vmatprep.subr.mxu0 0.0
  %720 = vmatpush1.msra.mxu0 0.0
  %721 = vmatprep.subr.mxu0 0.0
  %722 = vmatpush1.msra.mxu0 0.0
  %723 = vmatprep.mubr.f32.mxu0 0.0
  %724 = vmatmul.mubr.f32.gmra.mrb[0].mxu0 %v657
  %v725 = vpop.f32.mrb[0].mxu0
  %v726 = vadd.f32 0.0, %v725
  %v727 = vpop.f32.mrb[0].mxu0
  %728 = vdwg.mxu0
  %v730 = vrot.slane %v726, 1
  %v731 = vrot.slane %v726, 2
  %v732 = vrot.slane %v726, 3
  %v733 = vrot.slane %v726, 4
  %v734 = vrot.slane %v726, 5
  %v735 = vrot.slane %v726, 6
  %v736 = vrot.slane %v726, 7
  %v745 = vadd.f32 %v628, %v726
  %v746 = vadd.f32 %v629, %v730
  %v747 = vadd.f32 %v630, %v731
  %v748 = vadd.f32 %v631, %v732
  %v749 = vadd.f32 %v632, %v733
  %v750 = vadd.f32 %v633, %v734
  %v751 = vadd.f32 %v634, %v735
  %v752 = vadd.f32 %v635, %v736
  %v753 = vtanh.pop %v745
  %v754 = vtanh.pop %v746
  %v755 = vtanh.pop %v747
  %v756 = vtanh.pop %v748
  %v757 = vtanh.pop %v749
  %v758 = vtanh.pop %v750
  %v759 = vtanh.pop %v751
  %v760 = vtanh.pop %v752
  %v761 = vld [vmem:[%s0 + $0x5] sm:$0x1]
  %v762 = vld [vmem:[%s0 + $0xd] sm:$0x1]
  %v763 = vld [vmem:[%s0 + $0x15] sm:$0x1]
  %v764 = vld [vmem:[%s0 + $0x1d] sm:$0x1]
  %v765 = vld [vmem:[%s0 + $0x25] sm:$0x1]
  %v766 = vld [vmem:[%s0 + $0x2d] sm:$0x1]
  %v767 = vld [vmem:[%s0 + $0x35] sm:$0x1]
  %v768 = vld [vmem:[%s0 + $0x3d] sm:$0x1]
  %v777 = vrot.slane %v754, 7
  %v778 = vsel %vm239, %v777, %v753
  %v779 = vrot.slane %v755, 6
  %v780 = vsel %vm242, %v779, %v778
  %v781 = vrot.slane %v756, 5
  %v782 = vsel %vm245, %v781, %v780
  %v783 = vrot.slane %v757, 4
  %v784 = vsel %vm248, %v783, %v782
  %v785 = vrot.slane %v758, 3
  %v786 = vsel %vm251, %v785, %v784
  %v787 = vrot.slane %v759, 2
  %v788 = vsel %vm254, %v787, %v786
  %v789 = vrot.slane %v760, 1
  %v790 = vsel %vm257, %v789, %v788
  %792 = vmatprep.subr.mxu0 0.0
  %793 = vmatpush1.msra.mxu0 %v95
  %794 = vmatprep.subr.mxu0 0.0
  %795 = vmatpush1.msra.mxu0 %v96
  %796 = vmatprep.subr.mxu0 0.0
  %797 = vmatpush1.msra.mxu0 %v97
  %798 = vmatprep.subr.mxu0 0.0
  %799 = vmatpush1.msra.mxu0 %v98
  %800 = vmatprep.subr.mxu0 0.0
  %801 = vmatpush1.msra.mxu0 %v99
  %802 = vmatprep.subr.mxu0 0.0
  %803 = vmatpush1.msra.mxu0 %v100
  %804 = vmatprep.subr.mxu0 0.0
  %805 = vmatpush1.msra.mxu0 %v101
  %806 = vmatprep.subr.mxu0 0.0
  %807 = vmatpush1.msra.mxu0 %v102
  %808 = vmatprep.subr.mxu0 0.0
  %809 = vmatpush1.msra.mxu0 %v103
  %810 = vmatprep.subr.mxu0 0.0
  %811 = vmatpush1.msra.mxu0 %v104
  %812 = vmatprep.subr.mxu0 0.0
  %813 = vmatpush1.msra.mxu0 %v105
  %814 = vmatprep.subr.mxu0 0.0
  %815 = vmatpush1.msra.mxu0 %v106
  %816 = vmatprep.subr.mxu0 0.0
  %817 = vmatpush1.msra.mxu0 %v107
  %818 = vmatprep.subr.mxu0 0.0
  %819 = vmatpush1.msra.mxu0 %v108
  %820 = vmatprep.subr.mxu0 0.0
  %821 = vmatpush1.msra.mxu0 %v109
  %822 = vmatprep.subr.mxu0 0.0
  %823 = vmatpush1.msra.mxu0 %v110
  %824 = vmatprep.subr.mxu0 0.0
  %825 = vmatpush1.msra.mxu0 0.0
  %826 = vmatprep.subr.mxu0 0.0
  %827 = vmatpush1.msra.mxu0 0.0
  %828 = vmatprep.subr.mxu0 0.0
  %829 = vmatpush1.msra.mxu0 0.0
  %830 = vmatprep.subr.mxu0 0.0
  %831 = vmatpush1.msra.mxu0 0.0
  %832 = vmatprep.subr.mxu0 0.0
  %833 = vmatpush1.msra.mxu0 0.0
  %834 = vmatprep.subr.mxu0 0.0
  %835 = vmatpush1.msra.mxu0 0.0
  %836 = vmatprep.subr.mxu0 0.0
  %837 = vmatpush1.msra.mxu0 0.0
  %838 = vmatprep.subr.mxu0 0.0
  %839 = vmatpush1.msra.mxu0 0.0
  %840 = vmatprep.subr.mxu0 0.0
  %841 = vmatpush1.msra.mxu0 0.0
  %842 = vmatprep.subr.mxu0 0.0
  %843 = vmatpush1.msra.mxu0 0.0
  %844 = vmatprep.subr.mxu0 0.0
  %845 = vmatpush1.msra.mxu0 0.0
  %846 = vmatprep.subr.mxu0 0.0
  %847 = vmatpush1.msra.mxu0 0.0
  %848 = vmatprep.subr.mxu0 0.0
  %849 = vmatpush1.msra.mxu0 0.0
  %850 = vmatprep.subr.mxu0 0.0
  %851 = vmatpush1.msra.mxu0 0.0
  %852 = vmatprep.subr.mxu0 0.0
  %853 = vmatpush1.msra.mxu0 0.0
  %854 = vmatprep.subr.mxu0 0.0
  %855 = vmatpush1.msra.mxu0 0.0
  %856 = vmatprep.mubr.f32.mxu0 0.0
  %857 = vmatmul.mubr.f32.gmra.mrb[0].mxu0 %v790
  %v858 = vpop.f32.mrb[0].mxu0
  %v859 = vadd.f32 0.0, %v858
  %v860 = vpop.f32.mrb[0].mxu0
  %861 = vdwg.mxu0
  %v863 = vrot.slane %v859, 1
  %v864 = vrot.slane %v859, 2
  %v865 = vrot.slane %v859, 3
  %v866 = vrot.slane %v859, 4
  %v867 = vrot.slane %v859, 5
  %v868 = vrot.slane %v859, 6
  %v869 = vrot.slane %v859, 7
  %v878 = vadd.f32 %v761, %v859
  %v879 = vadd.f32 %v762, %v863
  %v880 = vadd.f32 %v763, %v864
  %v881 = vadd.f32 %v764, %v865
  %v882 = vadd.f32 %v765, %v866
  %v883 = vadd.f32 %v766, %v867
  %v884 = vadd.f32 %v767, %v868
  %v885 = vadd.f32 %v768, %v869
  %v886 = vtanh.pop %v878
  %v887 = vtanh.pop %v879
  %v888 = vtanh.pop %v880
  %v889 = vtanh.pop %v881
  %v890 = vtanh.pop %v882
  %v891 = vtanh.pop %v883
  %v892 = vtanh.pop %v884
  %v893 = vtanh.pop %v885
  %v894 = vld [vmem:[%s0 + $0x6] sm:$0x1]
  %v895 = vld [vmem:[%s0 + $0xe] sm:$0x1]
  %v896 = vld [vmem:[%s0 + $0x16] sm:$0x1]
  %v897 = vld [vmem:[%s0 + $0x1e] sm:$0x1]
  %v898 = vld [vmem:[%s0 + $0x26] sm:$0x1]
  %v899 = vld [vmem:[%s0 + $0x2e] sm:$0x1]
  %v900 = vld [vmem:[%s0 + $0x36] sm:$0x1]
  %v901 = vld [vmem:[%s0 + $0x3e] sm:$0x1]
  %v910 = vrot.slane %v887, 7
  %v911 = vsel %vm239, %v910, %v886
  %v912 = vrot.slane %v888, 6
  %v913 = vsel %vm242, %v912, %v911
  %v914 = vrot.slane %v889, 5
  %v915 = vsel %vm245, %v914, %v913
  %v916 = vrot.slane %v890, 4
  %v917 = vsel %vm248, %v916, %v915
  %v918 = vrot.slane %v891, 3
  %v919 = vsel %vm251, %v918, %v917
  %v920 = vrot.slane %v892, 2
  %v921 = vsel %vm254, %v920, %v919
  %v922 = vrot.slane %v893, 1
  %v923 = vsel %vm257, %v922, %v921
  %925 = vmatprep.subr.mxu0 0.0
  %926 = vmatpush1.msra.mxu0 %v95
  %927 = vmatprep.subr.mxu0 0.0
  %928 = vmatpush1.msra.mxu0 %v96
  %929 = vmatprep.subr.mxu0 0.0
  %930 = vmatpush1.msra.mxu0 %v97
  %931 = vmatprep.subr.mxu0 0.0
  %932 = vmatpush1.msra.mxu0 %v98
  %933 = vmatprep.subr.mxu0 0.0
  %934 = vmatpush1.msra.mxu0 %v99
  %935 = vmatprep.subr.mxu0 0.0
  %936 = vmatpush1.msra.mxu0 %v100
  %937 = vmatprep.subr.mxu0 0.0
  %938 = vmatpush1.msra.mxu0 %v101
  %939 = vmatprep.subr.mxu0 0.0
  %940 = vmatpush1.msra.mxu0 %v102
  %941 = vmatprep.subr.mxu0 0.0
  %942 = vmatpush1.msra.mxu0 %v103
  %943 = vmatprep.subr.mxu0 0.0
  %944 = vmatpush1.msra.mxu0 %v104
  %945 = vmatprep.subr.mxu0 0.0
  %946 = vmatpush1.msra.mxu0 %v105
  %947 = vmatprep.subr.mxu0 0.0
  %948 = vmatpush1.msra.mxu0 %v106
  %949 = vmatprep.subr.mxu0 0.0
  %950 = vmatpush1.msra.mxu0 %v107
  %951 = vmatprep.subr.mxu0 0.0
  %952 = vmatpush1.msra.mxu0 %v108
  %953 = vmatprep.subr.mxu0 0.0
  %954 = vmatpush1.msra.mxu0 %v109
  %955 = vmatprep.subr.mxu0 0.0
  %956 = vmatpush1.msra.mxu0 %v110
  %957 = vmatprep.subr.mxu0 0.0
  %958 = vmatpush1.msra.mxu0 0.0
  %959 = vmatprep.subr.mxu0 0.0
  %960 = vmatpush1.msra.mxu0 0.0
  %961 = vmatprep.subr.mxu0 0.0
  %962 = vmatpush1.msra.mxu0 0.0
  %963 = vmatprep.subr.mxu0 0.0
  %964 = vmatpush1.msra.mxu0 0.0
  %965 = vmatprep.subr.mxu0 0.0
  %966 = vmatpush1.msra.mxu0 0.0
  %967 = vmatprep.subr.mxu0 0.0
  %968 = vmatpush1.msra.mxu0 0.0
  %969 = vmatprep.subr.mxu0 0.0
  %970 = vmatpush1.msra.mxu0 0.0
  %971 = vmatprep.subr.mxu0 0.0
  %972 = vmatpush1.msra.mxu0 0.0
  %973 = vmatprep.subr.mxu0 0.0
  %974 = vmatpush1.msra.mxu0 0.0
  %975 = vmatprep.subr.mxu0 0.0
  %976 = vmatpush1.msra.mxu0 0.0
  %977 = vmatprep.subr.mxu0 0.0
  %978 = vmatpush1.msra.mxu0 0.0
  %979 = vmatprep.subr.mxu0 0.0
  %980 = vmatpush1.msra.mxu0 0.0
  %981 = vmatprep.subr.mxu0 0.0
  %982 = vmatpush1.msra.mxu0 0.0
  %983 = vmatprep.subr.mxu0 0.0
  %984 = vmatpush1.msra.mxu0 0.0
  %985 = vmatprep.subr.mxu0 0.0
  %986 = vmatpush1.msra.mxu0 0.0
  %987 = vmatprep.subr.mxu0 0.0
  %988 = vmatpush1.msra.mxu0 0.0
  %989 = vmatprep.mubr.f32.mxu0 0.0
  %990 = vmatmul.mubr.f32.gmra.mrb[0].mxu0 %v923
  %v991 = vpop.f32.mrb[0].mxu0
  %v992 = vadd.f32 0.0, %v991
  %v993 = vpop.f32.mrb[0].mxu0
  %994 = vdwg.mxu0
  %v996 = vrot.slane %v992, 1
  %v997 = vrot.slane %v992, 2
  %v998 = vrot.slane %v992, 3
  %v999 = vrot.slane %v992, 4
  %v1000 = vrot.slane %v992, 5
  %v1001 = vrot.slane %v992, 6
  %v1002 = vrot.slane %v992, 7
  %v1011 = vadd.f32 %v894, %v992
  %v1012 = vadd.f32 %v895, %v996
  %v1013 = vadd.f32 %v896, %v997
  %v1014 = vadd.f32 %v897, %v998
  %v1015 = vadd.f32 %v898, %v999
  %v1016 = vadd.f32 %v899, %v1000
  %v1017 = vadd.f32 %v900, %v1001
  %v1018 = vadd.f32 %v901, %v1002
  %v1019 = vtanh.pop %v1011
  %v1020 = vtanh.pop %v1012
  %v1021 = vtanh.pop %v1013
  %v1022 = vtanh.pop %v1014
  %v1023 = vtanh.pop %v1015
  %v1024 = vtanh.pop %v1016
  %v1025 = vtanh.pop %v1017
  %v1026 = vtanh.pop %v1018
  %v1027 = vld [vmem:[%s0 + $0x7] sm:$0x1]
  %v1028 = vld [vmem:[%s0 + $0xf] sm:$0x1]
  %v1029 = vld [vmem:[%s0 + $0x17] sm:$0x1]
  %v1030 = vld [vmem:[%s0 + $0x1f] sm:$0x1]
  %v1031 = vld [vmem:[%s0 + $0x27] sm:$0x1]
  %v1032 = vld [vmem:[%s0 + $0x2f] sm:$0x1]
  %v1033 = vld [vmem:[%s0 + $0x37] sm:$0x1]
  %v1034 = vld [vmem:[%s0 + $0x3f] sm:$0x1]
  %v1043 = vrot.slane %v1020, 7
  %v1044 = vsel %vm239, %v1043, %v1019
  %v1045 = vrot.slane %v1021, 6
  %v1046 = vsel %vm242, %v1045, %v1044
  %v1047 = vrot.slane %v1022, 5
  %v1048 = vsel %vm245, %v1047, %v1046
  %v1049 = vrot.slane %v1023, 4
  %v1050 = vsel %vm248, %v1049, %v1048
  %v1051 = vrot.slane %v1024, 3
  %v1052 = vsel %vm251, %v1051, %v1050
  %v1053 = vrot.slane %v1025, 2
  %v1054 = vsel %vm254, %v1053, %v1052
  %v1055 = vrot.slane %v1026, 1
  %v1056 = vsel %vm257, %v1055, %v1054
  %1058 = vmatprep.subr.mxu0 0.0
  %1059 = vmatpush1.msra.mxu0 %v95
  %1060 = vmatprep.subr.mxu0 0.0
  %1061 = vmatpush1.msra.mxu0 %v96
  %1062 = vmatprep.subr.mxu0 0.0
  %1063 = vmatpush1.msra.mxu0 %v97
  %1064 = vmatprep.subr.mxu0 0.0
  %1065 = vmatpush1.msra.mxu0 %v98
  %1066 = vmatprep.subr.mxu0 0.0
  %1067 = vmatpush1.msra.mxu0 %v99
  %1068 = vmatprep.subr.mxu0 0.0
  %1069 = vmatpush1.msra.mxu0 %v100
  %1070 = vmatprep.subr.mxu0 0.0
  %1071 = vmatpush1.msra.mxu0 %v101
  %1072 = vmatprep.subr.mxu0 0.0
  %1073 = vmatpush1.msra.mxu0 %v102
  %1074 = vmatprep.subr.mxu0 0.0
  %1075 = vmatpush1.msra.mxu0 %v103
  %1076 = vmatprep.subr.mxu0 0.0
  %1077 = vmatpush1.msra.mxu0 %v104
  %1078 = vmatprep.subr.mxu0 0.0
  %1079 = vmatpush1.msra.mxu0 %v105
  %1080 = vmatprep.subr.mxu0 0.0
  %1081 = vmatpush1.msra.mxu0 %v106
  %1082 = vmatprep.subr.mxu0 0.0
  %1083 = vmatpush1.msra.mxu0 %v107
  %1084 = vmatprep.subr.mxu0 0.0
  %1085 = vmatpush1.msra.mxu0 %v108
  %1086 = vmatprep.subr.mxu0 0.0
  %1087 = vmatpush1.msra.mxu0 %v109
  %1088 = vmatprep.subr.mxu0 0.0
  %1089 = vmatpush1.msra.mxu0 %v110
  %1090 = vmatprep.subr.mxu0 0.0
  %1091 = vmatpush1.msra.mxu0 0.0
  %1092 = vmatprep.subr.mxu0 0.0
  %1093 = vmatpush1.msra.mxu0 0.0
  %1094 = vmatprep.subr.mxu0 0.0
  %1095 = vmatpush1.msra.mxu0 0.0
  %1096 = vmatprep.subr.mxu0 0.0
  %1097 = vmatpush1.msra.mxu0 0.0
  %1098 = vmatprep.subr.mxu0 0.0
  %1099 = vmatpush1.msra.mxu0 0.0
  %1100 = vmatprep.subr.mxu0 0.0
  %1101 = vmatpush1.msra.mxu0 0.0
  %1102 = vmatprep.subr.mxu0 0.0
  %1103 = vmatpush1.msra.mxu0 0.0
  %1104 = vmatprep.subr.mxu0 0.0
  %1105 = vmatpush1.msra.mxu0 0.0
  %1106 = vmatprep.subr.mxu0 0.0
  %1107 = vmatpush1.msra.mxu0 0.0
  %1108 = vmatprep.subr.mxu0 0.0
  %1109 = vmatpush1.msra.mxu0 0.0
  %1110 = vmatprep.subr.mxu0 0.0
  %1111 = vmatpush1.msra.mxu0 0.0
  %1112 = vmatprep.subr.mxu0 0.0
  %1113 = vmatpush1.msra.mxu0 0.0
  %1114 = vmatprep.subr.mxu0 0.0
  %1115 = vmatpush1.msra.mxu0 0.0
  %1116 = vmatprep.subr.mxu0 0.0
  %1117 = vmatpush1.msra.mxu0 0.0
  %1118 = vmatprep.subr.mxu0 0.0
  %1119 = vmatpush1.msra.mxu0 0.0
  %1120 = vmatprep.subr.mxu0 0.0
  %1121 = vmatpush1.msra.mxu0 0.0
  %1122 = vmatprep.mubr.f32.mxu0 0.0
  %1123 = vmatmul.mubr.f32.gmra.mrb[0].mxu0 %v1056
  %v1124 = vpop.f32.mrb[0].mxu0
  %v1125 = vadd.f32 0.0, %v1124
  %v1126 = vpop.f32.mrb[0].mxu0
  %1127 = vdwg.mxu0
  %v1129 = vrot.slane %v1125, 1
  %v1130 = vrot.slane %v1125, 2
  %v1131 = vrot.slane %v1125, 3
  %v1132 = vrot.slane %v1125, 4
  %v1133 = vrot.slane %v1125, 5
  %v1134 = vrot.slane %v1125, 6
  %v1135 = vrot.slane %v1125, 7
  %v1144 = vadd.f32 %v1027, %v1125
  %v1145 = vadd.f32 %v1028, %v1129
  %v1146 = vadd.f32 %v1029, %v1130
  %v1147 = vadd.f32 %v1030, %v1131
  %v1148 = vadd.f32 %v1031, %v1132
  %v1149 = vadd.f32 %v1032, %v1133
  %v1150 = vadd.f32 %v1033, %v1134
  %v1151 = vadd.f32 %v1034, %v1135
  %v1152 = vtanh.pop %v1144
  %v1153 = vtanh.pop %v1145
  %v1154 = vtanh.pop %v1146
  %v1155 = vtanh.pop %v1147
  %v1156 = vtanh.pop %v1148
  %v1157 = vtanh.pop %v1149
  %v1158 = vtanh.pop %v1150
  %v1159 = vtanh.pop %v1151
  %v1168 = vrot.slane %v1153, 7
  %v1169 = vsel %vm239, %v1168, %v1152
  %v1170 = vrot.slane %v1154, 6
  %v1171 = vsel %vm242, %v1170, %v1169
  %v1172 = vrot.slane %v1155, 5
  %v1173 = vsel %vm245, %v1172, %v1171
  %v1174 = vrot.slane %v1156, 4
  %v1175 = vsel %vm248, %v1174, %v1173
  %v1176 = vrot.slane %v1157, 3
  %v1177 = vsel %vm251, %v1176, %v1175
  %v1178 = vrot.slane %v1158, 2
  %v1179 = vsel %vm254, %v1178, %v1177
  %v1180 = vrot.slane %v1159, 1
  %v1181 = vsel %vm257, %v1180, %v1179
  %1183 = vst [vmem:[#allocation3] sm:$0xff] %v1181
  // Predicated region
  $region52: #{rnn_forward.3} parent=0 // pred_check
    %p1184 = pneg %p15
  $region53: #{rnn_forward.3} parent=0 // pred_check_branch
    %1186 = sbr.rel (%p1184) target = $region55
  $region54: #{rnn_forward.3} parent=0 // pred_region
    %v1187 = vld [vmem:[#allocation3] sm:$0xff]
    %v1188 = vld [vmem:[%s2] sm:$0xff]
    %v1189 = vld [vmem:[%s2 + $0x8] sm:$0xff]
    %v1190 = vld [vmem:[%s2 + $0x10] sm:$0xff]
    %v1191 = vld [vmem:[%s2 + $0x18] sm:$0xff]
    %v1192 = vld [vmem:[%s2 + $0x20] sm:$0xff]
    %v1193 = vld [vmem:[%s2 + $0x28] sm:$0xff]
    %v1194 = vld [vmem:[%s2 + $0x30] sm:$0xff]
    %v1195 = vld [vmem:[%s2 + $0x38] sm:$0xff]
    %v1196 = vld [vmem:[%s2 + $0x40] sm:$0xff]
    %v1197 = vld [vmem:[%s2 + $0x48] sm:$0xff]
    %v1198 = vld [vmem:[%s2 + $0x50] sm:$0xff]
    %v1199 = vld [vmem:[%s2 + $0x58] sm:$0xff]
    %v1200 = vld [vmem:[%s2 + $0x60] sm:$0xff]
    %v1201 = vld [vmem:[%s2 + $0x68] sm:$0xff]
    %v1202 = vld [vmem:[%s2 + $0x70] sm:$0xff]
    %v1203 = vld [vmem:[%s2 + $0x78] sm:$0xff]
    %v1204 = vld [vmem:[%s3] sm:$0x1]
    %v1206 = vlaneseq
    %v1207 = vshrl.u32 %v1206, 7
    %v1208 = vsub.s32 0, %v1207
    %v1209 = vrot.slane %v1204, %v1208
    %1211 = vmatprep.subr.mxu0 0.0
    %1212 = vmatpush1.msra.mxu0 %v1188
    %1213 = vmatprep.subr.mxu0 0.0
    %1214 = vmatpush1.msra.mxu0 %v1189
    %1215 = vmatprep.subr.mxu0 0.0
    %1216 = vmatpush1.msra.mxu0 %v1190
    %1217 = vmatprep.subr.mxu0 0.0
    %1218 = vmatpush1.msra.mxu0 %v1191
    %1219 = vmatprep.subr.mxu0 0.0
    %1220 = vmatpush1.msra.mxu0 %v1192
    %1221 = vmatprep.subr.mxu0 0.0
    %1222 = vmatpush1.msra.mxu0 %v1193
    %1223 = vmatprep.subr.mxu0 0.0
    %1224 = vmatpush1.msra.mxu0 %v1194
    %1225 = vmatprep.subr.mxu0 0.0
    %1226 = vmatpush1.msra.mxu0 %v1195
    %1227 = vmatprep.subr.mxu0 0.0
    %1228 = vmatpush1.msra.mxu0 %v1196
    %1229 = vmatprep.subr.mxu0 0.0
    %1230 = vmatpush1.msra.mxu0 %v1197
    %1231 = vmatprep.subr.mxu0 0.0
    %1232 = vmatpush1.msra.mxu0 %v1198
    %1233 = vmatprep.subr.mxu0 0.0
    %1234 = vmatpush1.msra.mxu0 %v1199
    %1235 = vmatprep.subr.mxu0 0.0
    %1236 = vmatpush1.msra.mxu0 %v1200
    %1237 = vmatprep.subr.mxu0 0.0
    %1238 = vmatpush1.msra.mxu0 %v1201
    %1239 = vmatprep.subr.mxu0 0.0
    %1240 = vmatpush1.msra.mxu0 %v1202
    %1241 = vmatprep.subr.mxu0 0.0
    %1242 = vmatpush1.msra.mxu0 %v1203
    %1243 = vmatprep.subr.mxu0 0.0
    %1244 = vmatpush1.msra.mxu0 0.0
    %1245 = vmatprep.subr.mxu0 0.0
    %1246 = vmatpush1.msra.mxu0 0.0
    %1247 = vmatprep.subr.mxu0 0.0
    %1248 = vmatpush1.msra.mxu0 0.0
    %1249 = vmatprep.subr.mxu0 0.0
    %1250 = vmatpush1.msra.mxu0 0.0
    %1251 = vmatprep.subr.mxu0 0.0
    %1252 = vmatpush1.msra.mxu0 0.0
    %1253 = vmatprep.subr.mxu0 0.0
    %1254 = vmatpush1.msra.mxu0 0.0
    %1255 = vmatprep.subr.mxu0 0.0
    %1256 = vmatpush1.msra.mxu0 0.0
    %1257 = vmatprep.subr.mxu0 0.0
    %1258 = vmatpush1.msra.mxu0 0.0
    %1259 = vmatprep.subr.mxu0 0.0
    %1260 = vmatpush1.msra.mxu0 0.0
    %1261 = vmatprep.subr.mxu0 0.0
    %1262 = vmatpush1.msra.mxu0 0.0
    %1263 = vmatprep.subr.mxu0 0.0
    %1264 = vmatpush1.msra.mxu0 0.0
    %1265 = vmatprep.subr.mxu0 0.0
    %1266 = vmatpush1.msra.mxu0 0.0
    %1267 = vmatprep.subr.mxu0 0.0
    %1268 = vmatpush1.msra.mxu0 0.0
    %1269 = vmatprep.subr.mxu0 0.0
    %1270 = vmatpush1.msra.mxu0 0.0
    %1271 = vmatprep.subr.mxu0 0.0
    %1272 = vmatpush1.msra.mxu0 0.0
    %1273 = vmatprep.subr.mxu0 0.0
    %1274 = vmatpush1.msra.mxu0 0.0
    %1275 = vmatprep.mubr.f32.mxu0 0.0
    %1276 = vmatmul.mubr.f32.gmra.mrb[0].mxu0 %v1187
    %v1277 = vpop.f32.mrb[0].mxu0
    %v1278 = vadd.f32 %v1209, %v1277
    %v1279 = vpop.f32.mrb[0].mxu0
    %1280 = vdwg.mxu0
    %v1281 = vxor.u32 %v1278, 2147483648
    %v1282 = vmul.f32 %v1281, 1.442695
    %v1283 = vpow.pop %v1282
    %v1284 = vadd.f32 %v1283, 1.0
    %v1285 = vrcp.pop %v1284
    %v1286 = vmul.f32 1.0, %v1285
    %1287 = vst [vmem:[%s4] sm:$0xff] %v1286
  $region55: #{rnn_forward.3} parent=0 // pred_fallthru
    _
  // Predicated region
  $region56: #{rnn_forward.3} parent=0 // pred_check
    _
  $region57: #{rnn_forward.3} parent=0 // pred_check_branch
    %1289 = sbr.rel (0) target = $region59
  $region58: #{rnn_forward.3} parent=0 // pred_region
    _
  $region59: #{rnn_forward.3} parent=0 // pred_fallthru
    _
  // Predicated region
  $region60: #{rnn_forward.3} parent=0 // pred_check
    _
  $region61: #{rnn_forward.3} parent=0 // pred_check_branch
    %1291 = sbr.rel (0) target = $region63
  $region62: #{rnn_forward.3} parent=0 // pred_region
    _
  $region63: #{rnn_forward.3} parent=0 // pred_fallthru
    _
  %1292 = vsyncmov [#allocation4]
  %s1293 = vpop.sfrf %1292
  %p1294 = scmp.eq.s32.totalorder %s1293, 0
  %p1295 = pneg %p1294
  %1297 = shalt.err (%p1295)

</llo_original>
